<compile_context>
chip_gen: v5e
topology: v5e:2x2
jax: 0.10.0
libtpu: 0.0.40
codegen_flags: <defaults>
</compile_context>

<pallas_src>
from functools import partial

import jax
import jax.numpy as jnp
from jax.experimental import pallas as pl
from jax.experimental.pallas import tpu as pltpu

EPS = 1e-5                      # nn.LayerNorm default


# ---------------------------------------------------------------------------
# Generation-aware VMEM limit (computed once at import; safe fallback).
# ---------------------------------------------------------------------------
def _compute_vmem_limit():
    try:
        cap = int(pltpu.get_tpu_info().vmem_capacity_bytes)
        # ~75% of physical, capped at 100 MiB:
        #   v5e/v6e (128 MiB) -> 96 MiB, v7x (64 MiB) -> 48 MiB.
        return min(100 * 1024 * 1024, (cap * 3) // 4)
    except Exception:
        return 48 * 1024 * 1024   # safe on every generation


_VMEM_LIMIT = _compute_vmem_limit()


# ---------------------------------------------------------------------------
# Single-buffering of constant (weight) inputs: probe ONCE at import.
# ---------------------------------------------------------------------------
def _probe_single_buffer():
    try:
        def _probe(x_ref, o_ref):
            o_ref[...] = x_ref[...] + 1.0

        f = pl.pallas_call(
            _probe,
            out_shape=jax.ShapeDtypeStruct((16, 128), jnp.float32),
            grid=(2,),
            in_specs=[pl.BlockSpec((8, 128), lambda i: (0, 0),
                                   pipeline_mode=pl.Buffered(1))],
            out_specs=pl.BlockSpec((8, 128), lambda i: (i, 0)),
        )
        jax.block_until_ready(f(jnp.zeros((8, 128), jnp.float32)))
        return True
    except Exception:
        return False


_SINGLE_BUFFER_OK = _probe_single_buffer()


def _const_param_spec(p):
    """BlockSpec for an input whose block never changes across the grid."""
    zeros = (0,) * p.ndim
    idx = lambda i, _z=zeros: _z
    if _SINGLE_BUFFER_OK:
        return pl.BlockSpec(p.shape, idx, pipeline_mode=pl.Buffered(1))
    return pl.BlockSpec(p.shape, idx)


# ---------------------------------------------------------------------------
# In-kernel building blocks (values already in VMEM; flat (Bt*L, E) layout)
# ---------------------------------------------------------------------------
def _layer_norm(v, g, b):
    mu = jnp.mean(v, axis=-1, keepdims=True)
    var = jnp.mean(jnp.square(v - mu), axis=-1, keepdims=True)
    return (v - mu) * jax.lax.rsqrt(var + EPS) * g + b


def _attention(q3, k3, v3, keep, pw, pb, n_heads, inv_scale):
    """Multi-head attention core.

    q3: (Bt, Lq, E); k3/v3: (Bt, Lk, E) (any float dtype, cast to bf16 here).
    keep: bool, broadcastable to (Bt, Lq, Lk); True = attend.
    pw: (E, E) bf16 output projection (in, out); pb: (1, E) f32.
    Scores are per-head 3D einsums (single batch dim); softmax in f32;
    output projection is one E-deep contraction on the concatenated context.
    Returns (Bt*Lq, E) f32.
    """
    Bt, Lq, E = q3.shape
    D = E // n_heads
    q16 = q3.astype(jnp.bfloat16)
    k16 = k3.astype(jnp.bfloat16)
    v16 = v3.astype(jnp.bfloat16)

    ctx_heads = []
    for h in range(n_heads):
        sl = slice(h * D, (h + 1) * D)
        s = jnp.einsum('bqd,bkd->bqk', q16[:, :, sl], k16[:, :, sl],
                       preferred_element_type=jnp.float32) * inv_scale
        s = jnp.where(keep, s, -1e20)
        s = s - jnp.max(s, axis=-1, keepdims=True)
        p = jnp.exp(s)
        attn = p * pl.reciprocal(jnp.sum(p, axis=-1, keepdims=True), approx=True)
        ctx_heads.append(
            jnp.einsum('bqk,bkd->bqd', attn.astype(jnp.bfloat16), v16[:, :, sl],
                       preferred_element_type=jnp.float32))

    ctx = jnp.concatenate(ctx_heads, axis=-1).reshape(Bt * Lq, E)
    return jnp.dot(ctx.astype(jnp.bfloat16), pw,
                   preferred_element_type=jnp.float32) + pb


def _ffn(xflat, w1, fb1, w2, fb2):
    h = jnp.maximum(
        jnp.dot(xflat.astype(jnp.bfloat16), w1,
                preferred_element_type=jnp.float32) + fb1, 0.0)
    return jnp.dot(h.astype(jnp.bfloat16), w2,
                   preferred_element_type=jnp.float32) + fb2


def _qkv_fused(xflat, wqkv, bqkv, Bt, L, E):
    """Fused QKV projection: (Bt*L, E) @ (E, 3E)."""
    qkv = jnp.dot(xflat.astype(jnp.bfloat16), wqkv,
                  preferred_element_type=jnp.float32) + bqkv
    q3 = qkv[:, 0 * E:1 * E].reshape(Bt, L, E)
    k3 = qkv[:, 1 * E:2 * E].reshape(Bt, L, E)
    v3 = qkv[:, 2 * E:3 * E].reshape(Bt, L, E)
    return q3, k3, v3


# ---------------------------------------------------------------------------
# Pallas kernels: whole encoder / decoder STACK per pallas_call
# (shared weights across blocks -> layer loop lives inside the kernel).
# ---------------------------------------------------------------------------
def encoder_stack_kernel(n_heads, n_blocks,
                         x_ref, kpad_ref,
                         wqkv, bqkv, pw, pb, g1, b1,
                         w1, fb1, w2, fb2, g2, b2,
                         out_ref):
    Bt, L, E = x_ref.shape
    inv_scale = 1.0 / (float(E) ** 0.5)
    keep = (kpad_ref[...] > 0.0)          # (Bt, 1, L) key-padding keep mask

    Wqkv, Bqkv = wqkv[...], bqkv[...]
    Pw, Pb = pw[...], pb[...]
    G1, B1, G2, B2 = g1[...], b1[...], g2[...], b2[...]
    W1, Fb1, W2, Fb2 = w1[...], fb1[...], w2[...], fb2[...]

    def layer(_, xflat):                   # xflat: (Bt*L, E) f32, VMEM-resident
        q3, k3, v3 = _qkv_fused(xflat, Wqkv, Bqkv, Bt, L, E)
        att = _attention(q3, k3, v3, keep, Pw, Pb, n_heads, inv_scale)
        x1 = _layer_norm(att + xflat, G1, B1)
        ff = _ffn(x1, W1, Fb1, W2, Fb2)
        return _layer_norm(ff + x1, G2, B2)

    xflat = x_ref[...].reshape(Bt * L, E)
    xflat = jax.lax.fori_loop(0, n_blocks, layer, xflat)
    out_ref[...] = xflat.reshape(Bt, L, E)


def decoder_stack_kernel(n_heads, n_blocks,
                         trg_ref, mem_ref, tpad_ref, spad_ref,
                         swqkv, sbqkv, spw, spb, g1, b1,
                         cwq, cbq, cwkv, cbkv, cpw, cpb, g2, b2,
                         w1, fb1, w2, fb2, g3, b3,
                         out_ref):
    Bt, Lt, E = trg_ref.shape
    Ls = mem_ref.shape[1]
    inv_scale = 1.0 / (float(E) ** 0.5)

    # Causal mask built in-kernel: no (B, Lt, Lt) HBM stream.
    rows = jax.lax.broadcasted_iota(jnp.int32, (Lt, Lt), 0)
    cols = jax.lax.broadcasted_iota(jnp.int32, (Lt, Lt), 1)
    causal = rows >= cols                                       # (Lt, Lt)
    keep_self = jnp.logical_and(causal[None], tpad_ref[...] > 0.0)  # (Bt,Lt,Lt)
    keep_cross = spad_ref[...] > 0.0                                # (Bt,1,Ls)

    SWqkv, SBqkv, SPw, SPb = swqkv[...], sbqkv[...], spw[...], spb[...]
    CWq, CBq, CPw, CPb = cwq[...], cbq[...], cpw[...], cpb[...]
    G1, B1, G2, B2, G3, B3 = g1[...], b1[...], g2[...], b2[...], g3[...], b3[...]
    W1, Fb1, W2, Fb2 = w1[...], fb1[...], w2[...], fb2[...]

    # Cross-attention K/V depend only on the (shared) weights and the encoder
    # memory -> identical for every decoder layer; project ONCE, keep resident.
    memflat = mem_ref[...].reshape(Bt * Ls, E)
    kv = jnp.dot(memflat.astype(jnp.bfloat16), cwkv[...],
                 preferred_element_type=jnp.float32) + cbkv[...]
    ck3 = kv[:, :E].reshape(Bt, Ls, E).astype(jnp.bfloat16)
    cv3 = kv[:, E:].reshape(Bt, Ls, E).astype(jnp.bfloat16)

    def layer(_, xflat):                   # xflat: (Bt*Lt, E) f32
        # masked causal self-attention
        q3, k3, v3 = _qkv_fused(xflat, SWqkv, SBqkv, Bt, Lt, E)
        sa = _attention(q3, k3, v3, keep_self, SPw, SPb, n_heads, inv_scale)
        x1 = _layer_norm(xflat + sa, G1, B1)

        # cross attention (query from target, K/V hoisted above)
        qc = (jnp.dot(x1.astype(jnp.bfloat16), CWq,
                      preferred_element_type=jnp.float32) + CBq)
        ca = _attention(qc.reshape(Bt, Lt, E), ck3, cv3, keep_cross,
                        CPw, CPb, n_heads, inv_scale)
        x2 = _layer_norm(x1 + ca, G2, B2)

        ff = _ffn(x2, W1, Fb1, W2, Fb2)
        return _layer_norm(x2 + ff, G3, B3)

    xflat = trg_ref[...].reshape(Bt * Lt, E)
    xflat = jax.lax.fori_loop(0, n_blocks, layer, xflat)
    out_ref[...] = xflat.reshape(Bt, Lt, E)


def linear_kernel(x_ref, w_ref, b_ref, out_ref):
    Bt, L, E = x_ref.shape
    tN = w_ref.shape[1]
    y = jnp.dot(x_ref[...].reshape(Bt * L, E).astype(jnp.bfloat16), w_ref[...],
                preferred_element_type=jnp.float32) + b_ref[...]
    out_ref[...] = y.reshape(Bt, L, tN)


# ---------------------------------------------------------------------------
# pallas_call wrappers
# ---------------------------------------------------------------------------
def _compiler_params(grid_ndim):
    return pltpu.CompilerParams(
        dimension_semantics=("parallel",) * grid_ndim,
        vmem_limit_bytes=_VMEM_LIMIT)


def _pick_block_b(B, requested=None):
    """Largest batch block that divides B while keeping >= 2 grid steps
    (so the 'parallel' batch axis can split across v7x's two TensorCores)."""
    if requested is not None:
        Bt = max(1, min(requested, B))
    else:
        Bt = max(1, B // 2)
    while B % Bt != 0:
        Bt -= 1
    return Bt
    # TODO(synk): additionally bound Bt by a per-generation VMEM budget for
    #             very large L*E blocks.


def encoder_stack(x, kpad, layer_params, n_heads, n_blocks, Bt):
    B, L, E = x.shape
    assert B % Bt == 0
    in_specs = [pl.BlockSpec((Bt, L, E), lambda i: (i, 0, 0)),
                pl.BlockSpec((Bt, 1, L), lambda i: (i, 0, 0))]
    in_specs += [_const_param_spec(p) for p in layer_params]
    grid_spec = pltpu.PrefetchScalarGridSpec(
        num_scalar_prefetch=0, grid=(B // Bt,), in_specs=in_specs,
        out_specs=pl.BlockSpec((Bt, L, E), lambda i: (i, 0, 0)))
    return pl.pallas_call(
        partial(encoder_stack_kernel, n_heads, n_blocks),
        out_shape=jax.ShapeDtypeStruct((B, L, E), jnp.float32),
        grid_spec=grid_spec,
        compiler_params=_compiler_params(1),
    )(x, kpad, *layer_params)


def decoder_stack(trg, mem, tpad, spad, layer_params, n_heads, n_blocks, Bt):
    B, Lt, E = trg.shape
    Ls = mem.shape[1]
    assert B % Bt == 0
    in_specs = [pl.BlockSpec((Bt, Lt, E), lambda i: (i, 0, 0)),
                pl.BlockSpec((Bt, Ls, E), lambda i: (i, 0, 0)),
                pl.BlockSpec((Bt, 1, Lt), lambda i: (i, 0, 0)),
                pl.BlockSpec((Bt, 1, Ls), lambda i: (i, 0, 0))]
    in_specs += [_const_param_spec(p) for p in layer_params]
    grid_spec = pltpu.PrefetchScalarGridSpec(
        num_scalar_prefetch=0, grid=(B // Bt,), in_specs=in_specs,
        out_specs=pl.BlockSpec((Bt, Lt, E), lambda i: (i, 0, 0)))
    return pl.pallas_call(
        partial(decoder_stack_kernel, n_heads, n_blocks),
        out_shape=jax.ShapeDtypeStruct((B, Lt, E), jnp.float32),
        grid_spec=grid_spec,
        compiler_params=_compiler_params(1),
    )(trg, mem, tpad, spad, *layer_params)


def _vocab_tile(V):
    for t in (2048, 1024, 512, 256, 128):
        if V % t == 0:
            return t
    return V          # small / irregular vocab: single tile (full dim)


def linear_proj(x, w, b, Bt):
    """Final vocab projection, tiled over the vocab axis."""
    B, L, E = x.shape
    V = w.shape[1]
    assert B % Bt == 0
    tN = _vocab_tile(V)
    grid = (B // Bt, V // tN)
    in_specs = [pl.BlockSpec((Bt, L, E), lambda i, j: (i, 0, 0)),
                pl.BlockSpec((E, tN), lambda i, j: (0, j)),
                pl.BlockSpec((1, tN), lambda i, j: (0, j))]
    grid_spec = pltpu.PrefetchScalarGridSpec(
        num_scalar_prefetch=0, grid=grid, in_specs=in_specs,
        out_specs=pl.BlockSpec((Bt, L, tN), lambda i, j: (i, 0, j)))
    return pl.pallas_call(
        linear_kernel,
        out_shape=jax.ShapeDtypeStruct((B, L, V), jnp.float32),
        grid_spec=grid_spec,
        compiler_params=_compiler_params(2),
    )(x, w, b)


# ---------------------------------------------------------------------------
# Parameter init (synthetic; weight layout (in, out)) and kernel-side prep
# ---------------------------------------------------------------------------
def init_params(key, *, src_vocab, trg_vocab, embed_dim, ff_hid_dim, max_len):
    E, F = embed_dim, ff_hid_dim
    keys = iter(jax.random.split(key, 64))

    def w(shape, s=0.1):
        return (s * jax.random.normal(next(keys), shape)).astype(jnp.float32)

    def attn():
        return dict(qw=w((E, E)), qb=w((E,), 0.02), kw=w((E, E)), kb=w((E,), 0.02),
                    vw=w((E, E)), vb=w((E,), 0.02), pw=w((E, E)), pb=w((E,), 0.02))

    def mlp():
        return dict(w1=w((E, F)), fb1=w((F,), 0.02),
                    w2=w((F, E)), fb2=w((E,), 0.02))

    def ln():
        return dict(g=jnp.ones((E,), jnp.float32), b=jnp.zeros((E,), jnp.float32))

    return dict(
        enc_tok_emb=w((src_vocab, E), 0.3), enc_pos_emb=w((max_len, E), 0.3),
        dec_tok_emb=w((trg_vocab, E), 0.3), dec_pos_emb=w((max_len, E), 0.3),
        enc_layer=dict(attn=attn(), ln1=ln(), mlp=mlp(), ln2=ln()),
        dec_layer=dict(self_attn=attn(), ln1=ln(), cross_attn=attn(), ln2=ln(),
                       mlp=mlp(), ln3=ln()),
        fc_w=w((E, trg_vocab)), fc_b=jnp.zeros((trg_vocab,), jnp.float32),
    )


def _prep_self_attn(a):
    E = a['qw'].shape[0]
    wqkv = jnp.concatenate([a['qw'], a['kw'], a['vw']], axis=1).astype(jnp.bfloat16)
    bqkv = jnp.concatenate([a['qb'], a['kb'], a['vb']]).reshape(1, 3 * E)
    return [wqkv, bqkv,
            a['pw'].astype(jnp.bfloat16), a['pb'].reshape(1, E).astype(jnp.float32)]


def _prep_cross_attn(a):
    E = a['qw'].shape[0]
    wkv = jnp.concatenate([a['kw'], a['vw']], axis=1).astype(jnp.bfloat16)
    bkv = jnp.concatenate([a['kb'], a['vb']]).reshape(1, 2 * E)
    return [a['qw'].astype(jnp.bfloat16), a['qb'].reshape(1, E).astype(jnp.float32),
            wkv, bkv,
            a['pw'].astype(jnp.bfloat16), a['pb'].reshape(1, E).astype(jnp.float32)]


def _prep_ln(l):
    E = l['g'].shape[0]
    return [l['g'].reshape(1, E), l['b'].reshape(1, E)]


def _prep_mlp(m):
    F = m['w1'].shape[1]
    E = m['w2'].shape[1]
    return [m['w1'].astype(jnp.bfloat16), m['fb1'].reshape(1, F),
            m['w2'].astype(jnp.bfloat16), m['fb2'].reshape(1, E)]


def prep_encoder_layer(lp):
    return (_prep_self_attn(lp['attn']) + _prep_ln(lp['ln1'])
            + _prep_mlp(lp['mlp']) + _prep_ln(lp['ln2']))


def prep_decoder_layer(lp):
    return (_prep_self_attn(lp['self_attn']) + _prep_ln(lp['ln1'])
            + _prep_cross_attn(lp['cross_attn']) + _prep_ln(lp['ln2'])
            + _prep_mlp(lp['mlp']) + _prep_ln(lp['ln3']))


# ---------------------------------------------------------------------------
# Full Transformer forward (encoder stack -> decoder stack -> vocab proj)
# ---------------------------------------------------------------------------
def transformer_forward(src_ids, trg_ids, params, *, n_heads, n_blocks,
                        src_pad_idx, trg_pad_idx, block_b=None):
    B, Ls = src_ids.shape
    _, Lt = trg_ids.shape
    E = params['enc_tok_emb'].shape[1]
    assert E % n_heads == 0
    scale = float(E) ** 0.5

    # Padding "keep" masks (1 = attend); the causal part of the target mask is
    # generated inside the decoder kernel.
    src_keep = (src_ids != src_pad_idx).astype(jnp.float32)[:, None, :]  # (B,1,Ls)
    trg_keep = (trg_ids != trg_pad_idx).astype(jnp.float32)[:, None, :]  # (B,1,Lt)

    # TODO(synk): embedding gathers done in plain JAX (data-dependent gather).
    enc_x = params['enc_tok_emb'][src_ids] * scale + params['enc_pos_emb'][:Ls][None]
    dec_x = params['dec_tok_emb'][trg_ids] * scale + params['dec_pos_emb'][:Lt][None]

    enc_lp = prep_encoder_layer(params['enc_layer'])
    dec_lp = prep_decoder_layer(params['dec_layer'])

    Bt = _pick_block_b(B, block_b)

    enc_out = encoder_stack(enc_x, src_keep, enc_lp, n_heads, n_blocks, Bt)
    dec_out = decoder_stack(dec_x, enc_out, trg_keep, src_keep, dec_lp,
                            n_heads, n_blocks, Bt)
    return linear_proj(dec_out, params['fc_w'].astype(jnp.bfloat16),
                       params['fc_b'].reshape(1, -1).astype(jnp.float32), Bt)


# ---------------------------------------------------------------------------
# Pure-JAX f32 reference mirroring the PyTorch module exactly
# ---------------------------------------------------------------------------
def ref_transformer(src_ids, trg_ids, params, *, n_heads, n_blocks,
                    src_pad_idx, trg_pad_idx):
    E = params['enc_tok_emb'].shape[1]
    H = n_heads
    D = E // H
    scale = float(E) ** 0.5

    def ln(v, p):
        mu = jnp.mean(v, -1, keepdims=True)
        var = jnp.mean((v - mu) ** 2, -1, keepdims=True)
        return (v - mu) / jnp.sqrt(var + EPS) * p['g'] + p['b']

    def mha(xq, xkv, mask, p):
        B, Lq, _ = xq.shape
        Lk = xkv.shape[1]
        Q = (xq @ p['qw'] + p['qb']).reshape(B, Lq, H, D).transpose(0, 2, 1, 3)
        K = (xkv @ p['kw'] + p['kb']).reshape(B, Lk, H, D).transpose(0, 2, 1, 3)
        V = (xkv @ p['vw'] + p['vb']).reshape(B, Lk, H, D).transpose(0, 2, 1, 3)
        e = jnp.einsum('bhqd,bhkd->bhqk', Q, K) / scale
        e = jnp.where(mask, e, -1e20)
        a = jax.nn.softmax(e, axis=-1)
        ctx = jnp.einsum('bhqk,bhkd->bhqd', a, V).transpose(0, 2, 1, 3).reshape(B, Lq, E)
        return ctx @ p['pw'] + p['pb']

    def mlp(x, p):
        return jnp.maximum(x @ p['w1'] + p['fb1'], 0.0) @ p['w2'] + p['fb2']

    B, Ls = src_ids.shape
    _, Lt = trg_ids.shape
    src_mask = (src_ids != src_pad_idx)[:, None, None, :]
    trg_mask = (jnp.tril(jnp.ones((Lt, Lt), bool))[None, None]
                & (trg_ids != trg_pad_idx)[:, None, None, :])

    enc = params['enc_tok_emb'][src_ids] * scale + params['enc_pos_emb'][:Ls][None]
    ep = params['enc_layer']
    for _ in range(n_blocks):
        att = mha(enc, enc, src_mask, ep['attn'])
        x1 = ln(att + enc, ep['ln1'])
        enc = ln(mlp(x1, ep['mlp']) + x1, ep['ln2'])

    dec = params['dec_tok_emb'][trg_ids] * scale + params['dec_pos_emb'][:Lt][None]
    dp = params['dec_layer']
    for _ in range(n_blocks):
        sa = mha(dec, dec, trg_mask, dp['self_attn'])
        x1 = ln(dec + sa, dp['ln1'])
        ca = mha(x1, enc, src_mask, dp['cross_attn'])
        x2 = ln(x1 + ca, dp['ln2'])
        dec = ln(x2 + mlp(x2, dp['mlp']), dp['ln3'])

    return dec @ params['fc_w'] + params['fc_b']


# ---------------------------------------------------------------------------
if __name__ == "__main__":
    B, Ls, Lt = 2, 8, 8
    E, H, F = 32, 4, 64
    N_BLOCKS = 2
    SRC_VOCAB, TRG_VOCAB, MAX_LEN = 64, 64, 16
    SRC_PAD, TRG_PAD = 0, 0

    key = jax.random.PRNGKey(0)
    k_src, k_trg, k_par = jax.random.split(key, 3)

    src_ids = jax.random.randint(k_src, (B, Ls), 1, SRC_VOCAB)
    trg_ids = jax.random.randint(k_trg, (B, Lt), 1, TRG_VOCAB)
    # introduce padding so the masks are exercised
    src_ids = src_ids.at[1, -2:].set(SRC_PAD)
    trg_ids = trg_ids.at[0, -1].set(TRG_PAD)

    params = init_params(k_par, src_vocab=SRC_VOCAB, trg_vocab=TRG_VOCAB,
                         embed_dim=E, ff_hid_dim=F, max_len=MAX_LEN)

    out = transformer_forward(src_ids, trg_ids, params, n_heads=H,
                              n_blocks=N_BLOCKS, src_pad_idx=SRC_PAD,
                              trg_pad_idx=TRG_PAD)
    out = jax.block_until_ready(out)

    ref = ref_transformer(src_ids, trg_ids, params, n_heads=H, n_blocks=N_BLOCKS,
                          src_pad_idx=SRC_PAD, trg_pad_idx=TRG_PAD)

    assert out.shape == (B, Lt, TRG_VOCAB)
    err = float(jnp.max(jnp.abs(out - ref)))
    # bf16 MXU inputs + approx softmax reciprocal vs f32 reference -> loose tol
    tol = 5e-2 * (1.0 + float(jnp.max(jnp.abs(ref))))
    assert err < tol, f"max abs err {err} (tol {tol})"

    print("KERNEL_OK")
</pallas_src>

<mosaic_0001>
module attributes {stable_mosaic.version = 11 : i64} {
  func.func @_probe(%arg0: i32, %arg1: memref<8x128xf32, #tpu.memory_space<vmem>>, %arg2: memref<8x128xf32, #tpu.memory_space<vmem>>) attributes {dimension_semantics = [#tpu.dimension_semantics<arbitrary>], iteration_bounds = array<i64: 2>, scalar_prefetch = 0 : i64, scratch_operands = 0 : i64, tpu.core_type = #tpu.core_type<tc>, window_params = [{pipeline_mode = #tpu.pipeline_mode<synchronous>, transform_indices = @transform_0, window_bounds = array<i64: 8, 128>}, {transform_indices = @transform_1, window_bounds = array<i64: 8, 128>}]} {
    %c0 = arith.constant 0 : index
    %c0_0 = arith.constant 0 : index
    %0 = vector.load %arg1[%c0, %c0_0] : memref<8x128xf32, #tpu.memory_space<vmem>>, vector<8x128xf32>
    %cst = arith.constant 1.000000e+00 : f32
    %1 = vector.broadcast %cst : f32 to vector<8x128xf32>
    %2 = arith.addf %0, %1 : vector<8x128xf32>
    %c0_1 = arith.constant 0 : index
    %c0_2 = arith.constant 0 : index
    %3 = vector.load %arg2[%c0_1, %c0_2] : memref<8x128xf32, #tpu.memory_space<vmem>>, vector<8x128xf32>
    tpu.vector_store %arg2[%c0_1, %c0_2], %2 {strides = array<i32>} : memref<8x128xf32, #tpu.memory_space<vmem>>, vector<8x128xf32>,
    return
  }
  func.func @transform_0(%arg0: i32) -> (i32, i32) {
    %c0_i32 = arith.constant 0 : i32
    %c0_i32_0 = arith.constant 0 : i32
    %c0_i32_1 = arith.constant 0 : i32
    return %c0_i32, %c0_i32_0 : i32, i32
  }
  func.func @transform_1(%arg0: i32) -> (i32, i32) {
    %c0_i32 = arith.constant 0 : i32
    %c0_i32_0 = arith.constant 0 : i32
    return %arg0, %c0_i32 : i32, i32
  }
}

module attributes {stable_mosaic.version = 11 : i64} {
  func.func @encoder_stack_kernel(%arg0: i32, %arg1: memref<1x8x32xf32, #tpu.memory_space<vmem>>, %arg2: memref<1x1x8xf32, #tpu.memory_space<vmem>>, %arg3: memref<32x96xbf16, #tpu.memory_space<vmem>>, %arg4: memref<1x96xf32, #tpu.memory_space<vmem>>, %arg5: memref<32x32xbf16, #tpu.memory_space<vmem>>, %arg6: memref<1x32xf32, #tpu.memory_space<vmem>>, %arg7: memref<1x32xf32, #tpu.memory_space<vmem>>, %arg8: memref<1x32xf32, #tpu.memory_space<vmem>>, %arg9: memref<32x64xbf16, #tpu.memory_space<vmem>>, %arg10: memref<1x64xf32, #tpu.memory_space<vmem>>, %arg11: memref<64x32xbf16, #tpu.memory_space<vmem>>, %arg12: memref<1x32xf32, #tpu.memory_space<vmem>>, %arg13: memref<1x32xf32, #tpu.memory_space<vmem>>, %arg14: memref<1x32xf32, #tpu.memory_space<vmem>>, %arg15: memref<1x8x32xf32, #tpu.memory_space<vmem>>) attributes {dimension_semantics = [#tpu.dimension_semantics<parallel>], iteration_bounds = array<i64: 2>, scalar_prefetch = 0 : i64, scratch_operands = 0 : i64, tpu.core_type = #tpu.core_type<tc>, window_params = [{transform_indices = @transform_0, window_bounds = array<i64: 1, 8, 32>}, {transform_indices = @transform_1, window_bounds = array<i64: 1, 1, 8>}, {pipeline_mode = #tpu.pipeline_mode<synchronous>, transform_indices = @transform_2, window_bounds = array<i64: 32, 96>}, {pipeline_mode = #tpu.pipeline_mode<synchronous>, transform_indices = @transform_3, window_bounds = array<i64: 1, 96>}, {pipeline_mode = #tpu.pipeline_mode<synchronous>, transform_indices = @transform_4, window_bounds = array<i64: 32, 32>}, {pipeline_mode = #tpu.pipeline_mode<synchronous>, transform_indices = @transform_5, window_bounds = array<i64: 1, 32>}, {pipeline_mode = #tpu.pipeline_mode<synchronous>, transform_indices = @transform_6, window_bounds = array<i64: 1, 32>}, {pipeline_mode = #tpu.pipeline_mode<synchronous>, transform_indices = @transform_7, window_bounds = array<i64: 1, 32>}, {pipeline_mode = #tpu.pipeline_mode<synchronous>, transform_indices = @transform_8, window_bounds = array<i64: 32, 64>}, {pipeline_mode = #tpu.pipeline_mode<synchronous>, transform_indices = @transform_9, window_bounds = array<i64: 1, 64>}, {pipeline_mode = #tpu.pipeline_mode<synchronous>, transform_indices = @transform_10, window_bounds = array<i64: 64, 32>}, {pipeline_mode = #tpu.pipeline_mode<synchronous>, transform_indices = @transform_11, window_bounds = array<i64: 1, 32>}, {pipeline_mode = #tpu.pipeline_mode<synchronous>, transform_indices = @transform_12, window_bounds = array<i64: 1, 32>}, {pipeline_mode = #tpu.pipeline_mode<synchronous>, transform_indices = @transform_13, window_bounds = array<i64: 1, 32>}, {transform_indices = @transform_14, window_bounds = array<i64: 1, 8, 32>}]} {
    %c0 = arith.constant 0 : index
    %c0_0 = arith.constant 0 : index
    %c0_1 = arith.constant 0 : index
    %0 = vector.load %arg2[%c0, %c0_0, %c0_1] : memref<1x1x8xf32, #tpu.memory_space<vmem>>, vector<1x1x8xf32>
    %cst = arith.constant 0.000000e+00 : f32
    %1 = vector.broadcast %cst : f32 to vector<1x1x8xf32>
    %2 = arith.cmpf ogt, %0, %1 : vector<1x1x8xf32>
    %c0_2 = arith.constant 0 : index
    %c0_3 = arith.constant 0 : index
    %3 = vector.load %arg3[%c0_2, %c0_3] : memref<32x96xbf16, #tpu.memory_space<vmem>>, vector<32x96xbf16>
    %c0_4 = arith.constant 0 : index
    %c0_5 = arith.constant 0 : index
    %4 = vector.load %arg4[%c0_4, %c0_5] : memref<1x96xf32, #tpu.memory_space<vmem>>, vector<1x96xf32>
    %c0_6 = arith.constant 0 : index
    %c0_7 = arith.constant 0 : index
    %5 = vector.load %arg5[%c0_6, %c0_7] : memref<32x32xbf16, #tpu.memory_space<vmem>>, vector<32x32xbf16>
    %c0_8 = arith.constant 0 : index
    %c0_9 = arith.constant 0 : index
    %6 = vector.load %arg6[%c0_8, %c0_9] : memref<1x32xf32, #tpu.memory_space<vmem>>, vector<1x32xf32>
    %c0_10 = arith.constant 0 : index
    %c0_11 = arith.constant 0 : index
    %7 = vector.load %arg7[%c0_10, %c0_11] : memref<1x32xf32, #tpu.memory_space<vmem>>, vector<1x32xf32>
    %c0_12 = arith.constant 0 : index
    %c0_13 = arith.constant 0 : index
    %8 = vector.load %arg8[%c0_12, %c0_13] : memref<1x32xf32, #tpu.memory_space<vmem>>, vector<1x32xf32>
    %c0_14 = arith.constant 0 : index
    %c0_15 = arith.constant 0 : index
    %9 = vector.load %arg13[%c0_14, %c0_15] : memref<1x32xf32, #tpu.memory_space<vmem>>, vector<1x32xf32>
    %c0_16 = arith.constant 0 : index
    %c0_17 = arith.constant 0 : index
    %10 = vector.load %arg14[%c0_16, %c0_17] : memref<1x32xf32, #tpu.memory_space<vmem>>, vector<1x32xf32>
    %c0_18 = arith.constant 0 : index
    %c0_19 = arith.constant 0 : index
    %11 = vector.load %arg9[%c0_18, %c0_19] : memref<32x64xbf16, #tpu.memory_space<vmem>>, vector<32x64xbf16>
    %c0_20 = arith.constant 0 : index
    %c0_21 = arith.constant 0 : index
    %12 = vector.load %arg10[%c0_20, %c0_21] : memref<1x64xf32, #tpu.memory_space<vmem>>, vector<1x64xf32>
    %c0_22 = arith.constant 0 : index
    %c0_23 = arith.constant 0 : index
    %13 = vector.load %arg11[%c0_22, %c0_23] : memref<64x32xbf16, #tpu.memory_space<vmem>>, vector<64x32xbf16>
    %c0_24 = arith.constant 0 : index
    %c0_25 = arith.constant 0 : index
    %14 = vector.load %arg12[%c0_24, %c0_25] : memref<1x32xf32, #tpu.memory_space<vmem>>, vector<1x32xf32>
    %c0_26 = arith.constant 0 : index
    %c0_27 = arith.constant 0 : index
    %c0_28 = arith.constant 0 : index
    %15 = vector.load %arg1[%c0_26, %c0_27, %c0_28] : memref<1x8x32xf32, #tpu.memory_space<vmem>>, vector<1x8x32xf32>
    %16 = vector.shape_cast %15 : vector<1x8x32xf32> to vector<8x32xf32>
    %c0_i32 = arith.constant 0 : i32
    %c2_i32 = arith.constant 2 : i32
    %17 = arith.addi %c0_i32, %c2_i32 : i32
    %c1_i32 = arith.constant 1 : i32
    %18 = scf.for %arg16 = %c0_i32 to %17 step %c1_i32 iter_args(%arg17 = %16) -> (vector<8x32xf32>)  : i32 {
      %21 = arith.truncf %arg17 : vector<8x32xf32> to vector<8x32xbf16>
      %cst_32 = arith.constant dense<0.000000e+00> : vector<8x96xf32>
      %22 = tpu.matmul %21, %3, %cst_32 {dimension_numbers = #tpu.dot_dimension_numbers<[1], [0], [0], [1], [0, 0, 1, 1], [], []>} : vector<8x32xbf16>, vector<32x96xbf16>, vector<8x96xf32> -> vector<8x96xf32>
      %23 = vector.broadcast %4 : vector<1x96xf32> to vector<8x96xf32>
      %24 = arith.addf %22, %23 : vector<8x96xf32>
      %25 = vector.extract_strided_slice %24 {offsets = [0, 0], sizes = [8, 32], strides = [1, 1]} : vector<8x96xf32> to vector<8x32xf32>
      %26 = vector.shape_cast %25 : vector<8x32xf32> to vector<1x8x32xf32>
      %27 = vector.extract_strided_slice %24 {offsets = [0, 32], sizes = [8, 32], strides = [1, 1]} : vector<8x96xf32> to vector<8x32xf32>
      %28 = vector.shape_cast %27 : vector<8x32xf32> to vector<1x8x32xf32>
      %29 = vector.extract_strided_slice %24 {offsets = [0, 64], sizes = [8, 32], strides = [1, 1]} : vector<8x96xf32> to vector<8x32xf32>
      %30 = vector.shape_cast %29 : vector<8x32xf32> to vector<1x8x32xf32>
      %31 = arith.truncf %26 : vector<1x8x32xf32> to vector<1x8x32xbf16>
      %32 = arith.truncf %28 : vector<1x8x32xf32> to vector<1x8x32xbf16>
      %33 = arith.truncf %30 : vector<1x8x32xf32> to vector<1x8x32xbf16>
      %34 = vector.extract_strided_slice %31 {offsets = [0, 0, 0], sizes = [1, 8, 8], strides = [1, 1, 1]} : vector<1x8x32xbf16> to vector<1x8x8xbf16>
      %35 = vector.extract_strided_slice %32 {offsets = [0, 0, 0], sizes = [1, 8, 8], strides = [1, 1, 1]} : vector<1x8x32xbf16> to vector<1x8x8xbf16>
      "tpu.trace_start"() <{level = 10 : i32, message = "bqd,bkd->bqk"}> : () -> ()
      %cst_33 = arith.constant dense<0.000000e+00> : vector<1x8x8xf32>
      %36 = tpu.matmul %34, %35, %cst_33 {dimension_numbers = #tpu.dot_dimension_numbers<[2], [2], [1], [1], [0, 0, 0, 1, 1, 1], [0], [0]>} : vector<1x8x8xbf16>, vector<1x8x8xbf16>, vector<1x8x8xf32> -> vector<1x8x8xf32>
      "tpu.trace_stop"() : () -> ()
      %cst_34 = arith.constant 0.176776692 : f32
      %37 = vector.broadcast %cst_34 : f32 to vector<1x8x8xf32>
      %38 = arith.mulf %36, %37 : vector<1x8x8xf32>
      %cst_35 = arith.constant -1.000000e+20 : f32
      %39 = vector.shape_cast %2 : vector<1x1x8xi1> to vector<1x1x8xi1>
      %40 = vector.broadcast %39 : vector<1x1x8xi1> to vector<1x8x8xi1>
      %41 = vector.broadcast %cst_35 : f32 to vector<1x8x8xf32>
      %42 = arith.select %40, %38, %41 : vector<1x8x8xi1>, vector<1x8x8xf32>
      %cst_36 = arith.constant dense<0xFF800000> : vector<1x8xf32>
      %43 = vector.multi_reduction <maximumf>, %42, %cst_36 [2] : vector<1x8x8xf32> to vector<1x8xf32>
      %44 = vector.shape_cast %43 : vector<1x8xf32> to vector<1x8x1xf32>
      %45 = vector.broadcast %44 : vector<1x8x1xf32> to vector<1x8x8xf32>
      %46 = arith.subf %42, %45 : vector<1x8x8xf32>
      %47 = math.exp %46 : vector<1x8x8xf32>
      %cst_37 = arith.constant dense<0.000000e+00> : vector<1x8xf32>
      %48 = vector.multi_reduction <add>, %47, %cst_37 [2] : vector<1x8x8xf32> to vector<1x8xf32>
      %49 = vector.shape_cast %48 : vector<1x8xf32> to vector<1x8x1xf32>
      %50 = tpu.reciprocal %49 {approx = true} : vector<1x8x1xf32> -> vector<1x8x1xf32>
      %51 = vector.broadcast %50 : vector<1x8x1xf32> to vector<1x8x8xf32>
      %52 = arith.mulf %47, %51 : vector<1x8x8xf32>
      %53 = arith.truncf %52 : vector<1x8x8xf32> to vector<1x8x8xbf16>
      %54 = vector.extract_strided_slice %33 {offsets = [0, 0, 0], sizes = [1, 8, 8], strides = [1, 1, 1]} : vector<1x8x32xbf16> to vector<1x8x8xbf16>
      "tpu.trace_start"() <{level = 10 : i32, message = "bqk,bkd->bqd"}> : () -> ()
      %cst_38 = arith.constant dense<0.000000e+00> : vector<1x8x8xf32>
      %55 = tpu.matmul %53, %54, %cst_38 {dimension_numbers = #tpu.dot_dimension_numbers<[2], [1], [1], [2], [0, 0, 0, 1, 1, 2], [0], [0]>} : vector<1x8x8xbf16>, vector<1x8x8xbf16>, vector<1x8x8xf32> -> vector<1x8x8xf32>
      "tpu.trace_stop"() : () -> ()
      %56 = vector.extract_strided_slice %31 {offsets = [0, 0, 8], sizes = [1, 8, 8], strides = [1, 1, 1]} : vector<1x8x32xbf16> to vector<1x8x8xbf16>
      %57 = vector.extract_strided_slice %32 {offsets = [0, 0, 8], sizes = [1, 8, 8], strides = [1, 1, 1]} : vector<1x8x32xbf16> to vector<1x8x8xbf16>
      "tpu.trace_start"() <{level = 10 : i32, message = "bqd,bkd->bqk"}> : () -> ()
      %cst_39 = arith.constant dense<0.000000e+00> : vector<1x8x8xf32>
      %58 = tpu.matmul %56, %57, %cst_39 {dimension_numbers = #tpu.dot_dimension_numbers<[2], [2], [1], [1], [0, 0, 0, 1, 1, 1], [0], [0]>} : vector<1x8x8xbf16>, vector<1x8x8xbf16>, vector<1x8x8xf32> -> vector<1x8x8xf32>
      "tpu.trace_stop"() : () -> ()
      %cst_40 = arith.constant 0.176776692 : f32
      %59 = vector.broadcast %cst_40 : f32 to vector<1x8x8xf32>
      %60 = arith.mulf %58, %59 : vector<1x8x8xf32>
      %cst_41 = arith.constant -1.000000e+20 : f32
      %61 = vector.shape_cast %2 : vector<1x1x8xi1> to vector<1x1x8xi1>
      %62 = vector.broadcast %61 : vector<1x1x8xi1> to vector<1x8x8xi1>
      %63 = vector.broadcast %cst_41 : f32 to vector<1x8x8xf32>
      %64 = arith.select %62, %60, %63 : vector<1x8x8xi1>, vector<1x8x8xf32>
      %cst_42 = arith.constant dense<0xFF800000> : vector<1x8xf32>
      %65 = vector.multi_reduction <maximumf>, %64, %cst_42 [2] : vector<1x8x8xf32> to vector<1x8xf32>
      %66 = vector.shape_cast %65 : vector<1x8xf32> to vector<1x8x1xf32>
      %67 = vector.broadcast %66 : vector<1x8x1xf32> to vector<1x8x8xf32>
      %68 = arith.subf %64, %67 : vector<1x8x8xf32>
      %69 = math.exp %68 : vector<1x8x8xf32>
      %cst_43 = arith.constant dense<0.000000e+00> : vector<1x8xf32>
      %70 = vector.multi_reduction <add>, %69, %cst_43 [2] : vector<1x8x8xf32> to vector<1x8xf32>
      %71 = vector.shape_cast %70 : vector<1x8xf32> to vector<1x8x1xf32>
      %72 = tpu.reciprocal %71 {approx = true} : vector<1x8x1xf32> -> vector<1x8x1xf32>
      %73 = vector.broadcast %72 : vector<1x8x1xf32> to vector<1x8x8xf32>
      %74 = arith.mulf %69, %73 : vector<1x8x8xf32>
      %75 = arith.truncf %74 : vector<1x8x8xf32> to vector<1x8x8xbf16>
      %76 = vector.extract_strided_slice %33 {offsets = [0, 0, 8], sizes = [1, 8, 8], strides = [1, 1, 1]} : vector<1x8x32xbf16> to vector<1x8x8xbf16>
      "tpu.trace_start"() <{level = 10 : i32, message = "bqk,bkd->bqd"}> : () -> ()
      %cst_44 = arith.constant dense<0.000000e+00> : vector<1x8x8xf32>
      %77 = tpu.matmul %75, %76, %cst_44 {dimension_numbers = #tpu.dot_dimension_numbers<[2], [1], [1], [2], [0, 0, 0, 1, 1, 2], [0], [0]>} : vector<1x8x8xbf16>, vector<1x8x8xbf16>, vector<1x8x8xf32> -> vector<1x8x8xf32>
      "tpu.trace_stop"() : () -> ()
      %78 = vector.extract_strided_slice %31 {offsets = [0, 0, 16], sizes = [1, 8, 8], strides = [1, 1, 1]} : vector<1x8x32xbf16> to vector<1x8x8xbf16>
      %79 = vector.extract_strided_slice %32 {offsets = [0, 0, 16], sizes = [1, 8, 8], strides = [1, 1, 1]} : vector<1x8x32xbf16> to vector<1x8x8xbf16>
      "tpu.trace_start"() <{level = 10 : i32, message = "bqd,bkd->bqk"}> : () -> ()
      %cst_45 = arith.constant dense<0.000000e+00> : vector<1x8x8xf32>
      %80 = tpu.matmul %78, %79, %cst_45 {dimension_numbers = #tpu.dot_dimension_numbers<[2], [2], [1], [1], [0, 0, 0, 1, 1, 1], [0], [0]>} : vector<1x8x8xbf16>, vector<1x8x8xbf16>, vector<1x8x8xf32> -> vector<1x8x8xf32>
      "tpu.trace_stop"() : () -> ()
      %cst_46 = arith.constant 0.176776692 : f32
      %81 = vector.broadcast %cst_46 : f32 to vector<1x8x8xf32>
      %82 = arith.mulf %80, %81 : vector<1x8x8xf32>
      %cst_47 = arith.constant -1.000000e+20 : f32
      %83 = vector.shape_cast %2 : vector<1x1x8xi1> to vector<1x1x8xi1>
      %84 = vector.broadcast %83 : vector<1x1x8xi1> to vector<1x8x8xi1>
      %85 = vector.broadcast %cst_47 : f32 to vector<1x8x8xf32>
      %86 = arith.select %84, %82, %85 : vector<1x8x8xi1>, vector<1x8x8xf32>
      %cst_48 = arith.constant dense<0xFF800000> : vector<1x8xf32>
      %87 = vector.multi_reduction <maximumf>, %86, %cst_48 [2] : vector<1x8x8xf32> to vector<1x8xf32>
      %88 = vector.shape_cast %87 : vector<1x8xf32> to vector<1x8x1xf32>
      %89 = vector.broadcast %88 : vector<1x8x1xf32> to vector<1x8x8xf32>
      %90 = arith.subf %86, %89 : vector<1x8x8xf32>
      %91 = math.exp %90 : vector<1x8x8xf32>
      %cst_49 = arith.constant dense<0.000000e+00> : vector<1x8xf32>
      %92 = vector.multi_reduction <add>, %91, %cst_49 [2] : vector<1x8x8xf32> to vector<1x8xf32>
      %93 = vector.shape_cast %92 : vector<1x8xf32> to vector<1x8x1xf32>
      %94 = tpu.reciprocal %93 {approx = true} : vector<1x8x1xf32> -> vector<1x8x1xf32>
      %95 = vector.broadcast %94 : vector<1x8x1xf32> to vector<1x8x8xf32>
      %96 = arith.mulf %91, %95 : vector<1x8x8xf32>
      %97 = arith.truncf %96 : vector<1x8x8xf32> to vector<1x8x8xbf16>
      %98 = vector.extract_strided_slice %33 {offsets = [0, 0, 16], sizes = [1, 8, 8], strides = [1, 1, 1]} : vector<1x8x32xbf16> to vector<1x8x8xbf16>
      "tpu.trace_start"() <{level = 10 : i32, message = "bqk,bkd->bqd"}> : () -> ()
      %cst_50 = arith.constant dense<0.000000e+00> : vector<1x8x8xf32>
      %99 = tpu.matmul %97, %98, %cst_50 {dimension_numbers = #tpu.dot_dimension_numbers<[2], [1], [1], [2], [0, 0, 0, 1, 1, 2], [0], [0]>} : vector<1x8x8xbf16>, vector<1x8x8xbf16>, vector<1x8x8xf32> -> vector<1x8x8xf32>
      "tpu.trace_stop"() : () -> ()
      %100 = vector.extract_strided_slice %31 {offsets = [0, 0, 24], sizes = [1, 8, 8], strides = [1, 1, 1]} : vector<1x8x32xbf16> to vector<1x8x8xbf16>
      %101 = vector.extract_strided_slice %32 {offsets = [0, 0, 24], sizes = [1, 8, 8], strides = [1, 1, 1]} : vector<1x8x32xbf16> to vector<1x8x8xbf16>
      "tpu.trace_start"() <{level = 10 : i32, message = "bqd,bkd->bqk"}> : () -> ()
      %cst_51 = arith.constant dense<0.000000e+00> : vector<1x8x8xf32>
      %102 = tpu.matmul %100, %101, %cst_51 {dimension_numbers = #tpu.dot_dimension_numbers<[2], [2], [1], [1], [0, 0, 0, 1, 1, 1], [0], [0]>} : vector<1x8x8xbf16>, vector<1x8x8xbf16>, vector<1x8x8xf32> -> vector<1x8x8xf32>
      "tpu.trace_stop"() : () -> ()
      %cst_52 = arith.constant 0.176776692 : f32
      %103 = vector.broadcast %cst_52 : f32 to vector<1x8x8xf32>
      %104 = arith.mulf %102, %103 : vector<1x8x8xf32>
      %cst_53 = arith.constant -1.000000e+20 : f32
      %105 = vector.shape_cast %2 : vector<1x1x8xi1> to vector<1x1x8xi1>
      %106 = vector.broadcast %105 : vector<1x1x8xi1> to vector<1x8x8xi1>
      %107 = vector.broadcast %cst_53 : f32 to vector<1x8x8xf32>
      %108 = arith.select %106, %104, %107 : vector<1x8x8xi1>, vector<1x8x8xf32>
      %cst_54 = arith.constant dense<0xFF800000> : vector<1x8xf32>
      %109 = vector.multi_reduction <maximumf>, %108, %cst_54 [2] : vector<1x8x8xf32> to vector<1x8xf32>
      %110 = vector.shape_cast %109 : vector<1x8xf32> to vector<1x8x1xf32>
      %111 = vector.broadcast %110 : vector<1x8x1xf32> to vector<1x8x8xf32>
      %112 = arith.subf %108, %111 : vector<1x8x8xf32>
      %113 = math.exp %112 : vector<1x8x8xf32>
      %cst_55 = arith.constant dense<0.000000e+00> : vector<1x8xf32>
      %114 = vector.multi_reduction <add>, %113, %cst_55 [2] : vector<1x8x8xf32> to vector<1x8xf32>
      %115 = vector.shape_cast %114 : vector<1x8xf32> to vector<1x8x1xf32>
      %116 = tpu.reciprocal %115 {approx = true} : vector<1x8x1xf32> -> vector<1x8x1xf32>
      %117 = vector.broadcast %116 : vector<1x8x1xf32> to vector<1x8x8xf32>
      %118 = arith.mulf %113, %117 : vector<1x8x8xf32>
      %119 = arith.truncf %118 : vector<1x8x8xf32> to vector<1x8x8xbf16>
      %120 = vector.extract_strided_slice %33 {offsets = [0, 0, 24], sizes = [1, 8, 8], strides = [1, 1, 1]} : vector<1x8x32xbf16> to vector<1x8x8xbf16>
      "tpu.trace_start"() <{level = 10 : i32, message = "bqk,bkd->bqd"}> : () -> ()
      %cst_56 = arith.constant dense<0.000000e+00> : vector<1x8x8xf32>
      %121 = tpu.matmul %119, %120, %cst_56 {dimension_numbers = #tpu.dot_dimension_numbers<[2], [1], [1], [2], [0, 0, 0, 1, 1, 2], [0], [0]>} : vector<1x8x8xbf16>, vector<1x8x8xbf16>, vector<1x8x8xf32> -> vector<1x8x8xf32>
      "tpu.trace_stop"() : () -> ()
      %122 = tpu.concatenate %55, %77, %99, %121 in 2 : vector<1x8x8xf32>, vector<1x8x8xf32>, vector<1x8x8xf32>, vector<1x8x8xf32> -> vector<1x8x32xf32>
      %123 = vector.shape_cast %122 : vector<1x8x32xf32> to vector<8x32xf32>
      %124 = arith.truncf %123 : vector<8x32xf32> to vector<8x32xbf16>
      %cst_57 = arith.constant dense<0.000000e+00> : vector<8x32xf32>
      %125 = tpu.matmul %124, %5, %cst_57 {dimension_numbers = #tpu.dot_dimension_numbers<[1], [0], [0], [1], [0, 0, 1, 1], [], []>} : vector<8x32xbf16>, vector<32x32xbf16>, vector<8x32xf32> -> vector<8x32xf32>
      %126 = vector.broadcast %6 : vector<1x32xf32> to vector<8x32xf32>
      %127 = arith.addf %125, %126 : vector<8x32xf32>
      %128 = arith.addf %127, %arg17 : vector<8x32xf32>
      %cst_58 = arith.constant dense<0.000000e+00> : vector<8xf32>
      %129 = vector.multi_reduction <add>, %128, %cst_58 [1] : vector<8x32xf32> to vector<8xf32>
      %130 = vector.shape_cast %129 : vector<8xf32> to vector<8x1xf32>
      %cst_59 = arith.constant 3.200000e+01 : f32
      %131 = vector.broadcast %cst_59 : f32 to vector<8x1xf32>
      %132 = arith.divf %130, %131 : vector<8x1xf32>
      %133 = vector.broadcast %132 : vector<8x1xf32> to vector<8x32xf32>
      %134 = arith.subf %128, %133 : vector<8x32xf32>
      %135 = arith.mulf %134, %134 : vector<8x32xf32>
      %cst_60 = arith.constant dense<0.000000e+00> : vector<8xf32>
      %136 = vector.multi_reduction <add>, %135, %cst_60 [1] : vector<8x32xf32> to vector<8xf32>
      %137 = vector.shape_cast %136 : vector<8xf32> to vector<8x1xf32>
      %cst_61 = arith.constant 3.200000e+01 : f32
      %138 = vector.broadcast %cst_61 : f32 to vector<8x1xf32>
      %139 = arith.divf %137, %138 : vector<8x1xf32>
      %140 = vector.broadcast %132 : vector<8x1xf32> to vector<8x32xf32>
      %141 = arith.subf %128, %140 : vector<8x32xf32>
      %cst_62 = arith.constant 9.99999974E-6 : f32
      %142 = vector.broadcast %cst_62 : f32 to vector<8x1xf32>
      %143 = arith.addf %139, %142 : vector<8x1xf32>
      %144 = math.rsqrt %143 : vector<8x1xf32>
      %145 = vector.broadcast %144 : vector<8x1xf32> to vector<8x32xf32>
      %146 = arith.mulf %141, %145 : vector<8x32xf32>
      %147 = vector.broadcast %7 : vector<1x32xf32> to vector<8x32xf32>
      %148 = arith.mulf %146, %147 : vector<8x32xf32>
      %149 = vector.broadcast %8 : vector<1x32xf32> to vector<8x32xf32>
      %150 = arith.addf %148, %149 : vector<8x32xf32>
      %151 = arith.truncf %150 : vector<8x32xf32> to vector<8x32xbf16>
      %cst_63 = arith.constant dense<0.000000e+00> : vector<8x64xf32>
      %152 = tpu.matmul %151, %11, %cst_63 {dimension_numbers = #tpu.dot_dimension_numbers<[1], [0], [0], [1], [0, 0, 1, 1], [], []>} : vector<8x32xbf16>, vector<32x64xbf16>, vector<8x64xf32> -> vector<8x64xf32>
      %153 = vector.broadcast %12 : vector<1x64xf32> to vector<8x64xf32>
      %154 = arith.addf %152, %153 : vector<8x64xf32>
      %cst_64 = arith.constant 0.000000e+00 : f32
      %155 = vector.broadcast %cst_64 : f32 to vector<8x64xf32>
      %156 = arith.maximumf %154, %155 : vector<8x64xf32>
      %157 = arith.truncf %156 : vector<8x64xf32> to vector<8x64xbf16>
      %cst_65 = arith.constant dense<0.000000e+00> : vector<8x32xf32>
      %158 = tpu.matmul %157, %13, %cst_65 {dimension_numbers = #tpu.dot_dimension_numbers<[1], [0], [0], [1], [0, 0, 1, 1], [], []>} : vector<8x64xbf16>, vector<64x32xbf16>, vector<8x32xf32> -> vector<8x32xf32>
      %159 = vector.broadcast %14 : vector<1x32xf32> to vector<8x32xf32>
      %160 = arith.addf %158, %159 : vector<8x32xf32>
      %161 = arith.addf %160, %150 : vector<8x32xf32>
      %cst_66 = arith.constant dense<0.000000e+00> : vector<8xf32>
      %162 = vector.multi_reduction <add>, %161, %cst_66 [1] : vector<8x32xf32> to vector<8xf32>
      %163 = vector.shape_cast %162 : vector<8xf32> to vector<8x1xf32>
      %cst_67 = arith.constant 3.200000e+01 : f32
      %164 = vector.broadcast %cst_67 : f32 to vector<8x1xf32>
      %165 = arith.divf %163, %164 : vector<8x1xf32>
      %166 = vector.broadcast %165 : vector<8x1xf32> to vector<8x32xf32>
      %167 = arith.subf %161, %166 : vector<8x32xf32>
      %168 = arith.mulf %167, %167 : vector<8x32xf32>
      %cst_68 = arith.constant dense<0.000000e+00> : vector<8xf32>
      %169 = vector.multi_reduction <add>, %168, %cst_68 [1] : vector<8x32xf32> to vector<8xf32>
      %170 = vector.shape_cast %169 : vector<8xf32> to vector<8x1xf32>
      %cst_69 = arith.constant 3.200000e+01 : f32
      %171 = vector.broadcast %cst_69 : f32 to vector<8x1xf32>
      %172 = arith.divf %170, %171 : vector<8x1xf32>
      %173 = vector.broadcast %165 : vector<8x1xf32> to vector<8x32xf32>
      %174 = arith.subf %161, %173 : vector<8x32xf32>
      %cst_70 = arith.constant 9.99999974E-6 : f32
      %175 = vector.broadcast %cst_70 : f32 to vector<8x1xf32>
      %176 = arith.addf %172, %175 : vector<8x1xf32>
      %177 = math.rsqrt %176 : vector<8x1xf32>
      %178 = vector.broadcast %177 : vector<8x1xf32> to vector<8x32xf32>
      %179 = arith.mulf %174, %178 : vector<8x32xf32>
      %180 = vector.broadcast %9 : vector<1x32xf32> to vector<8x32xf32>
      %181 = arith.mulf %179, %180 : vector<8x32xf32>
      %182 = vector.broadcast %10 : vector<1x32xf32> to vector<8x32xf32>
      %183 = arith.addf %181, %182 : vector<8x32xf32>
      scf.yield %183 : vector<8x32xf32>
    }
    %19 = vector.shape_cast %18 : vector<8x32xf32> to vector<1x8x32xf32>
    %c0_29 = arith.constant 0 : index
    %c0_30 = arith.constant 0 : index
    %c0_31 = arith.constant 0 : index
    %20 = vector.load %arg15[%c0_29, %c0_30, %c0_31] : memref<1x8x32xf32, #tpu.memory_space<vmem>>, vector<1x8x32xf32>
    tpu.vector_store %arg15[%c0_29, %c0_30, %c0_31], %19 {strides = array<i32>} : memref<1x8x32xf32, #tpu.memory_space<vmem>>, vector<1x8x32xf32>,
    return
  }
  func.func @transform_0(%arg0: i32) -> (i32, i32, i32) {
    %c0_i32 = arith.constant 0 : i32
    %c0_i32_0 = arith.constant 0 : i32
    %c0_i32_1 = arith.constant 0 : i32
    return %arg0, %c0_i32, %c0_i32_0 : i32, i32, i32
  }
  func.func @transform_1(%arg0: i32) -> (i32, i32, i32) {
    %c0_i32 = arith.constant 0 : i32
    %c0_i32_0 = arith.constant 0 : i32
    %c0_i32_1 = arith.constant 0 : i32
    return %arg0, %c0_i32, %c0_i32_0 : i32, i32, i32
  }
  func.func @transform_2(%arg0: i32) -> (i32, i32) {
    %c0_i32 = arith.constant 0 : i32
    %c0_i32_0 = arith.constant 0 : i32
    %c0_i32_1 = arith.constant 0 : i32
    return %c0_i32, %c0_i32_0 : i32, i32
  }
  func.func @transform_3(%arg0: i32) -> (i32, i32) {
    %c0_i32 = arith.constant 0 : i32
    %c0_i32_0 = arith.constant 0 : i32
    %c0_i32_1 = arith.constant 0 : i32
    return %c0_i32, %c0_i32_0 : i32, i32
  }
  func.func @transform_4(%arg0: i32) -> (i32, i32) {
    %c0_i32 = arith.constant 0 : i32
    %c0_i32_0 = arith.constant 0 : i32
    %c0_i32_1 = arith.constant 0 : i32
    return %c0_i32, %c0_i32_0 : i32, i32
  }
  func.func @transform_5(%arg0: i32) -> (i32, i32) {
    %c0_i32 = arith.constant 0 : i32
    %c0_i32_0 = arith.constant 0 : i32
    %c0_i32_1 = arith.constant 0 : i32
    return %c0_i32, %c0_i32_0 : i32, i32
  }
  func.func @transform_6(%arg0: i32) -> (i32, i32) {
    %c0_i32 = arith.constant 0 : i32
    %c0_i32_0 = arith.constant 0 : i32
    %c0_i32_1 = arith.constant 0 : i32
    return %c0_i32, %c0_i32_0 : i32, i32
  }
  func.func @transform_7(%arg0: i32) -> (i32, i32) {
    %c0_i32 = arith.constant 0 : i32
    %c0_i32_0 = arith.constant 0 : i32
    %c0_i32_1 = arith.constant 0 : i32
    return %c0_i32, %c0_i32_0 : i32, i32
  }
  func.func @transform_8(%arg0: i32) -> (i32, i32) {
    %c0_i32 = arith.constant 0 : i32
    %c0_i32_0 = arith.constant 0 : i32
    %c0_i32_1 = arith.constant 0 : i32
    return %c0_i32, %c0_i32_0 : i32, i32
  }
  func.func @transform_9(%arg0: i32) -> (i32, i32) {
    %c0_i32 = arith.constant 0 : i32
    %c0_i32_0 = arith.constant 0 : i32
    %c0_i32_1 = arith.constant 0 : i32
    return %c0_i32, %c0_i32_0 : i32, i32
  }
  func.func @transform_10(%arg0: i32) -> (i32, i32) {
    %c0_i32 = arith.constant 0 : i32
    %c0_i32_0 = arith.constant 0 : i32
    %c0_i32_1 = arith.constant 0 : i32
    return %c0_i32, %c0_i32_0 : i32, i32
  }
  func.func @transform_11(%arg0: i32) -> (i32, i32) {
    %c0_i32 = arith.constant 0 : i32
    %c0_i32_0 = arith.constant 0 : i32
    %c0_i32_1 = arith.constant 0 : i32
    return %c0_i32, %c0_i32_0 : i32, i32
  }
  func.func @transform_12(%arg0: i32) -> (i32, i32) {
    %c0_i32 = arith.constant 0 : i32
    %c0_i32_0 = arith.constant 0 : i32
    %c0_i32_1 = arith.constant 0 : i32
    return %c0_i32, %c0_i32_0 : i32, i32
  }
  func.func @transform_13(%arg0: i32) -> (i32, i32) {
    %c0_i32 = arith.constant 0 : i32
    %c0_i32_0 = arith.constant 0 : i32
    %c0_i32_1 = arith.constant 0 : i32
    return %c0_i32, %c0_i32_0 : i32, i32
  }
  func.func @transform_14(%arg0: i32) -> (i32, i32, i32) {
    %c0_i32 = arith.constant 0 : i32
    %c0_i32_0 = arith.constant 0 : i32
    %c0_i32_1 = arith.constant 0 : i32
    return %arg0, %c0_i32, %c0_i32_0 : i32, i32, i32
  }
}

</mosaic_0001>

<llo_original>
// kernel: tpu_custom_call.1
$region0: #{tpu_custom_call.1}
  #allocation0 [shape = 'u32[]', space=smem, size = 0x4, offset = 0x4, fixed_abs, tag = 'smem constant byte address 0x4 - core index']
  #allocation1 [shape = 'u32[72,128]{1,0:T(1,128)}', space=vmem, size = 0x9000, scoped, tag = 'internal scratch']
  %s0 = inlined_call_operand.hbm [shape: f32[8,128], index: 0, kind: input, shape index: {}]
  %s1 = inlined_call_operand.hbm [shape: f32[16,128], index: 1, kind: output, shape index: {}]
  %s2 = sld [smem:[#allocation0]]
  $region41: #{tpu_custom_call.1} parent=0
    _
  %s4 = ssub.s32 1, %s2
  %s5 = scalar_select 0, %s4, %s2
  $region1: #{tpu_custom_call.1} parent=0
    #allocation2 [shape = 'u8[4096]{0}', space=vmem, size = 0x1000, scoped, tag = 'input window, operand 0, single buffered']
    #allocation3 [shape = 's32[2]{0}', space=sflag, size = 0x8, scoped, tag = 'scoped memory for tpu_custom_call.1']
    #allocation4 [shape = 's32[2]{0}', space=sflag, size = 0x8, scoped, tag = 'scoped memory for tpu_custom_call.1']
    #allocation5 [shape = 'u8[8192]{0}', space=vmem, size = 0x2000, scoped, tag = 'output window, operand 0']
    %6 = vsyncpa [#allocation3], 0
    %7 = vsyncpa [#allocation4], 0
    %s8 = scalar_lea.sflag [#allocation4], 1
    %9 = vsyncpa %s8, 0
    loop: start=0, step=1, limit=4
    $region2: #{tpu_custom_call.1} parent=1 // loop_pre_header
      _
    $region3: #{tpu_custom_call.1} parent=1 // loop_header
      %s11 = sphi 0, %s15
      %p12 = scmp.ge.s32.totalorder %s11, 4
      %s19 = sphi 0, %s19
      %s21 = sphi 0, %s19
      %s22 = sphi 0, %s21
      %s36 = sphi 0, %s22
      %s42 = sphi 0, %s44
      %s45 = sphi 0, %s42
      %s46 = sphi 0, %s45
      %s62 = sphi 0, %s46
    $region4: #{tpu_custom_call.1} parent=1 // loop_header_branch
      %14 = sbr.rel (%p12) target = $region8
    $region5: #{tpu_custom_call.1} parent=1 // loop_body
      %s16 = ssub.s32 %s11, 1
      %s17 = ssub.s32 %s11, 2
      %s18 = sadd.s32 %s11, 1
      %s20 = sadd.s32 %s19, 1
      %p23 = scmp.eq.s32.totalorder %s11, 1
      %p24 = scmp.ne.s32.totalorder %s19, %s21
      %p25 = scmp.eq.s32.totalorder %s11, 0
      %p26 = por %p24, %p25
      %p27 = scmp.ne.s32.totalorder %s19, %s21
      %p28 = scmp.eq.s32.totalorder %s16, 1
      %p29 = por %p27, %p28
      %p30 = scmp.ne.s32.totalorder %s21, %s22
      %p31 = scmp.eq.s32.totalorder %s16, 0
      %p32 = por %p30, %p31
      %p33 = scmp.ne.s32.totalorder %s21, %s22
      %p34 = scmp.eq.s32.totalorder %s17, 1
      %p35 = por %p33, %p34
      %p37 = scmp.ne.s32.totalorder %s22, %s36
      %p38 = scmp.eq.s32.totalorder %s17, 0
      %p39 = por %p37, %p38
      %s40 = ssub.s32 %s11, %s18
      %p41 = scmp.eq.s32.totalorder %s40, 0
      %s43 = sadd.s32 %s42, 1
      %s44 = scalar_select %p41, %s42, %s43
      %p47 = pneg %p41
      %p48 = scmp.eq.s32.totalorder %s11, 1
      %p49 = por %p47, %p48
      %p50 = scmp.ne.s32.totalorder %s42, %s45
      %p51 = scmp.eq.s32.totalorder %s11, 0
      %p52 = por %p50, %p51
      %p53 = scmp.ne.s32.totalorder %s42, %s45
      %p54 = scmp.eq.s32.totalorder %s16, 1
      %p55 = por %p53, %p54
      %p56 = scmp.ne.s32.totalorder %s45, %s46
      %p57 = scmp.eq.s32.totalorder %s16, 0
      %p58 = por %p56, %p57
      %p59 = scmp.ne.s32.totalorder %s45, %s46
      %p60 = scmp.eq.s32.totalorder %s17, 1
      %p61 = por %p59, %p60
      %p63 = scmp.ne.s32.totalorder %s46, %s62
      %p64 = scmp.eq.s32.totalorder %s17, 0
      %p65 = por %p63, %p64
      %p66 = scmp.le.s32.totalorder 1, %s11
      %p67 = scmp.lt.s32.totalorder %s11, 3
      %p68 = pnand %p66, %p67
      %p69 = pneg %p68
      // Predicated region
      $region9: #{tpu_custom_call.1} parent=5 // pred_check
        _
      $region10: #{tpu_custom_call.1} parent=5 // pred_check_branch
        %71 = sbr.rel (%p68) target = $region12
      $region11: #{tpu_custom_call.1} parent=5 // pred_region
        %s72 = ssub.s32 %s11, 1
        // Predicated region
        $region13: #{tpu_custom_call.1} parent=11 // pred_check
          %p73 = pneg %p32
        $region14: #{tpu_custom_call.1} parent=11 // pred_check_branch
          %75 = sbr.rel (%p73) target = $region16
        $region15: #{tpu_custom_call.1} parent=11 // pred_region
          %77 = vsyncadd [#allocation3], 0
          %s79 = sshll.u32 %s0, 4
          %s80 = int_to_ptr.hbm [resolvable:$true] %s79
          %s81 = sshll.u32 [#allocation2], 4
          %s82 = int_to_ptr.vmem [resolvable:$true] %s81
          %84 = dma.hbm_to_vmem [thread:$0]  %s80, 128, %s82, [#allocation3]
        $region16: #{tpu_custom_call.1} parent=11 // pred_fallthru
          _
      $region12: #{tpu_custom_call.1} parent=5 // pred_fallthru
        _
      %p85 = scmp.lt.s32.totalorder %s11, 2
      // Predicated region
      $region17: #{tpu_custom_call.1} parent=5 // pred_check
        %p86 = pneg %p85
      $region18: #{tpu_custom_call.1} parent=5 // pred_check_branch
        %88 = sbr.rel (%p86) target = $region20
      $region19: #{tpu_custom_call.1} parent=5 // pred_region
        _
      $region20: #{tpu_custom_call.1} parent=5 // pred_fallthru
        _
      %p89 = scmp.le.s32.totalorder 1, %s11
      %p90 = scmp.lt.s32.totalorder %s11, 3
      %p91 = pnand %p89, %p90
      %p92 = pneg %p91
      // Predicated region
      $region21: #{tpu_custom_call.1} parent=5 // pred_check
        _
      $region22: #{tpu_custom_call.1} parent=5 // pred_check_branch
        %94 = sbr.rel (%p91) target = $region24
      $region23: #{tpu_custom_call.1} parent=5 // pred_region
        %s95 = ssub.s32 %s11, 1
        // Predicated region
        $region25: #{tpu_custom_call.1} parent=23 // pred_check
          %p96 = pneg %p32
        $region26: #{tpu_custom_call.1} parent=23 // pred_check_branch
          %98 = sbr.rel (%p96) target = $region28
        $region27: #{tpu_custom_call.1} parent=23 // pred_region
          %100 = dma.done [#allocation3], 128
        $region28: #{tpu_custom_call.1} parent=23 // pred_fallthru
          _
        %p101 = pneg %p32
        %p102 = pneg %p29
        %p103 = pneg %p58
        %p104 = pneg %p55
        %s105 = sand.u32 %s45, 1
        %s106 = scalar_lea.sflag [#allocation4], %s105
        %s107 = sand.u32 %s45, 1
        %s108 = smul.addr %s107, 8
        %s109 = scalar_lea.vmem [#allocation5], %s108
        %v110 = vld [vmem:[#allocation2] sm:$0xff]
        %v111 = vadd.f32 %v110, 1.0
        %112 = vst [vmem:[%s109] sm:$0xff] %v111
        %s113 = sand.u32 %s45, 1
        %s114 = scalar_lea.sflag [#allocation4], %s113
        %s115 = sand.u32 %s45, 1
        %s116 = smul.addr %s115, 8
        %s117 = scalar_lea.vmem [#allocation5], %s116
        // Predicated region
        $region29: #{tpu_custom_call.1} parent=23 // pred_check
          %p118 = pneg %p55
        $region30: #{tpu_custom_call.1} parent=23 // pred_check_branch
          %120 = sbr.rel (%p118) target = $region32
        $region31: #{tpu_custom_call.1} parent=23 // pred_region
          %122 = vsyncadd %s114, 0
          %s123 = smul.addr %s16, 8
          %s124 = scalar_lea.hbm %s1, %s123
          %s126 = sshll.u32 %s117, 4
          %s127 = int_to_ptr.vmem [resolvable:$true] %s126
          %s128 = sshll.u32 %s124, 4
          %s129 = int_to_ptr.hbm [resolvable:$true] %s128
          %131 = dma.vmem_to_hbm [thread:$0]  %s127, 128, %s129, %s114
        $region32: #{tpu_custom_call.1} parent=23 // pred_fallthru
          _
      $region24: #{tpu_custom_call.1} parent=5 // pred_fallthru
        _
      %p132 = scmp.le.s32.totalorder 2, %s11
      // Predicated region
      $region33: #{tpu_custom_call.1} parent=5 // pred_check
        %p133 = pneg %p132
      $region34: #{tpu_custom_call.1} parent=5 // pred_check_branch
        %135 = sbr.rel (%p133) target = $region36
      $region35: #{tpu_custom_call.1} parent=5 // pred_region
        %s136 = ssub.s32 %s11, 2
        // Predicated region
        $region37: #{tpu_custom_call.1} parent=35 // pred_check
          %p137 = pneg %p61
        $region38: #{tpu_custom_call.1} parent=35 // pred_check_branch
          %139 = sbr.rel (%p137) target = $region40
        $region39: #{tpu_custom_call.1} parent=35 // pred_region
          %s140 = sand.u32 %s46, 1
          %s141 = scalar_lea.sflag [#allocation4], %s140
          %s142 = sand.u32 %s46, 1
          %s143 = smul.addr %s142, 8
          %s144 = scalar_lea.vmem [#allocation5], %s143
          %146 = dma.done %s141, 128
        $region40: #{tpu_custom_call.1} parent=35 // pred_fallthru
          _
      $region36: #{tpu_custom_call.1} parent=5 // pred_fallthru
        _
    $region6: #{tpu_custom_call.1} parent=1 // loop_footer
      %s15 = sadd.s32 1, %s11
    $region7: #{tpu_custom_call.1} parent=1 // loop_footer_branch
      %10 = sbr.rel target = $region3
    $region8: #{tpu_custom_call.1} parent=1 // loop_exit
      _
    %147 = vsyncpa [#allocation3], 1
    %s148 = scalar_lea.sflag [#allocation3], 1
    %149 = vsyncpa %s148, 1
    %150 = vsyncpa [#allocation4], 1
    %s151 = scalar_lea.sflag [#allocation4], 1
    %152 = vsyncpa %s151, 1

// kernel: tpu_custom_call.1
$region0: #{tpu_custom_call.1}
  #allocation0 [shape = 'u32[]', space=smem, size = 0x4, offset = 0x4, fixed_abs, tag = 'smem constant byte address 0x4 - core index']
  #allocation1 [shape = 'u32[72,128]{1,0:T(1,128)}', space=vmem, size = 0x9000, scoped, tag = 'internal scratch']
  %s0 = inlined_call_operand.vmem [shape: f32[2,8,32], index: 0, kind: input, shape index: {}]
  %s1 = inlined_call_operand.hbm [shape: f32[2,1,8], index: 1, kind: input, shape index: {}]
  %s2 = inlined_call_operand.vmem [shape: bf16[32,96], index: 2, kind: input, shape index: {}]
  %s3 = inlined_call_operand.vmem [shape: f32[1,96], index: 3, kind: input, shape index: {}]
  %s4 = inlined_call_operand.vmem [shape: bf16[32,32], index: 4, kind: input, shape index: {}]
  %s5 = inlined_call_operand.vmem [shape: f32[1,32], index: 5, kind: input, shape index: {}]
  %s6 = inlined_call_operand.vmem [shape: f32[1,32], index: 6, kind: input, shape index: {}]
  %s7 = inlined_call_operand.vmem [shape: f32[1,32], index: 7, kind: input, shape index: {}]
  %s8 = inlined_call_operand.hbm [shape: bf16[32,64], index: 8, kind: input, shape index: {}]
  %s9 = inlined_call_operand.vmem [shape: f32[1,64], index: 9, kind: input, shape index: {}]
  %s10 = inlined_call_operand.vmem [shape: bf16[64,32], index: 10, kind: input, shape index: {}]
  %s11 = inlined_call_operand.vmem [shape: f32[1,32], index: 11, kind: input, shape index: {}]
  %s12 = inlined_call_operand.vmem [shape: f32[1,32], index: 12, kind: input, shape index: {}]
  %s13 = inlined_call_operand.vmem [shape: f32[1,32], index: 13, kind: input, shape index: {}]
  %s14 = inlined_call_operand.hbm [shape: f32[2,8,32], index: 14, kind: output, shape index: {}]
  %s15 = sld [smem:[#allocation0]]
  $region104: #{tpu_custom_call.1} parent=0
    _
  %s17 = ssub.s32 1, %s15
  %s18 = scalar_select 0, %s17, %s15
  $region1: #{tpu_custom_call.1} parent=0
    #allocation2 [shape = 'u8[1024]{0}', space=vmem, size = 0x400, scoped, tag = 'input window, operand 1']
    #allocation3 [shape = 's32[2]{0}', space=sflag, size = 0x8, scoped, tag = 'scoped memory for tpu_custom_call.1']
    #allocation4 [shape = 's32[2]{0}', space=sflag, size = 0x8, scoped, tag = 'scoped memory for tpu_custom_call.1']
    #allocation5 [shape = 'u8[8192]{0}', space=vmem, size = 0x2000, scoped, tag = 'input window, operand 8, single buffered']
    #allocation6 [shape = 's32[1]{0}', space=sflag, size = 0x4, scoped, tag = 'scoped memory for tpu_custom_call.1']
    #allocation7 [shape = 'u8[8192]{0}', space=vmem, size = 0x2000, scoped, tag = 'output window, operand 0']
    %19 = vsyncpa [#allocation3], 0
    %s20 = scalar_lea.sflag [#allocation3], 1
    %21 = vsyncpa %s20, 0
    %22 = vsyncpa [#allocation6], 0
    %23 = vsyncpa [#allocation4], 0
    %s24 = scalar_lea.sflag [#allocation4], 1
    %25 = vsyncpa %s24, 0
    loop: start=0, step=1, limit=4
    $region2: #{tpu_custom_call.1} parent=1 // loop_pre_header
      _
    $region3: #{tpu_custom_call.1} parent=1 // loop_header
      %s27 = sphi 0, %s31
      %p28 = scmp.ge.s32.totalorder %s27, 4
      %s37 = sphi 0, %s39
      %s40 = sphi 0, %s37
      %s41 = sphi 0, %s40
      %s57 = sphi 0, %s41
      %s63 = sphi 0, %s65
      %s66 = sphi 0, %s63
      %s67 = sphi 0, %s66
      %s83 = sphi 0, %s67
      %s87 = sphi 0, %s87
      %s89 = sphi 0, %s87
      %s90 = sphi 0, %s89
      %s104 = sphi 0, %s90
      %s108 = sphi 0, %s108
      %s110 = sphi 0, %s108
      %s111 = sphi 0, %s110
      %s125 = sphi 0, %s111
      %s129 = sphi 0, %s129
      %s131 = sphi 0, %s129
      %s132 = sphi 0, %s131
      %s146 = sphi 0, %s132
      %s150 = sphi 0, %s150
      %s152 = sphi 0, %s150
      %s153 = sphi 0, %s152
      %s167 = sphi 0, %s153
      %s171 = sphi 0, %s171
      %s173 = sphi 0, %s171
      %s174 = sphi 0, %s173
      %s188 = sphi 0, %s174
      %s192 = sphi 0, %s192
      %s194 = sphi 0, %s192
      %s195 = sphi 0, %s194
      %s209 = sphi 0, %s195
      %s213 = sphi 0, %s213
      %s215 = sphi 0, %s213
      %s216 = sphi 0, %s215
      %s230 = sphi 0, %s216
      %s234 = sphi 0, %s234
      %s236 = sphi 0, %s234
      %s237 = sphi 0, %s236
      %s251 = sphi 0, %s237
      %s255 = sphi 0, %s255
      %s257 = sphi 0, %s255
      %s258 = sphi 0, %s257
      %s272 = sphi 0, %s258
      %s276 = sphi 0, %s276
      %s278 = sphi 0, %s276
      %s279 = sphi 0, %s278
      %s293 = sphi 0, %s279
      %s297 = sphi 0, %s297
      %s299 = sphi 0, %s297
      %s300 = sphi 0, %s299
      %s314 = sphi 0, %s300
      %s318 = sphi 0, %s318
      %s320 = sphi 0, %s318
      %s321 = sphi 0, %s320
      %s335 = sphi 0, %s321
      %s341 = sphi 0, %s343
      %s344 = sphi 0, %s341
      %s345 = sphi 0, %s344
      %s361 = sphi 0, %s345
    $region4: #{tpu_custom_call.1} parent=1 // loop_header_branch
      %30 = sbr.rel (%p28) target = $region8
    $region5: #{tpu_custom_call.1} parent=1 // loop_body
      %s32 = ssub.s32 %s27, 1
      %s33 = ssub.s32 %s27, 2
      %s34 = sadd.s32 %s27, 1
      %s35 = ssub.s32 %s27, %s34
      %p36 = scmp.eq.s32.totalorder %s35, 0
      %s38 = sadd.s32 %s37, 1
      %s39 = scalar_select %p36, %s37, %s38
      %p42 = pneg %p36
      %p43 = scmp.eq.s32.totalorder %s27, 1
      %p44 = por %p42, %p43
      %p45 = scmp.ne.s32.totalorder %s37, %s40
      %p46 = scmp.eq.s32.totalorder %s27, 0
      %p47 = por %p45, %p46
      %p48 = scmp.ne.s32.totalorder %s37, %s40
      %p49 = scmp.eq.s32.totalorder %s32, 1
      %p50 = por %p48, %p49
      %p51 = scmp.ne.s32.totalorder %s40, %s41
      %p52 = scmp.eq.s32.totalorder %s32, 0
      %p53 = por %p51, %p52
      %p54 = scmp.ne.s32.totalorder %s40, %s41
      %p55 = scmp.eq.s32.totalorder %s33, 1
      %p56 = por %p54, %p55
      %p58 = scmp.ne.s32.totalorder %s41, %s57
      %p59 = scmp.eq.s32.totalorder %s33, 0
      %p60 = por %p58, %p59
      %s61 = ssub.s32 %s27, %s34
      %p62 = scmp.eq.s32.totalorder %s61, 0
      %s64 = sadd.s32 %s63, 1
      %s65 = scalar_select %p62, %s63, %s64
      %p68 = pneg %p62
      %p69 = scmp.eq.s32.totalorder %s27, 1
      %p70 = por %p68, %p69
      %p71 = scmp.ne.s32.totalorder %s63, %s66
      %p72 = scmp.eq.s32.totalorder %s27, 0
      %p73 = por %p71, %p72
      %p74 = scmp.ne.s32.totalorder %s63, %s66
      %p75 = scmp.eq.s32.totalorder %s32, 1
      %p76 = por %p74, %p75
      %p77 = scmp.ne.s32.totalorder %s66, %s67
      %p78 = scmp.eq.s32.totalorder %s32, 0
      %p79 = por %p77, %p78
      %p80 = scmp.ne.s32.totalorder %s66, %s67
      %p81 = scmp.eq.s32.totalorder %s33, 1
      %p82 = por %p80, %p81
      %p84 = scmp.ne.s32.totalorder %s67, %s83
      %p85 = scmp.eq.s32.totalorder %s33, 0
      %p86 = por %p84, %p85
      %s88 = sadd.s32 %s87, 1
      %p91 = scmp.eq.s32.totalorder %s27, 1
      %p92 = scmp.ne.s32.totalorder %s87, %s89
      %p93 = scmp.eq.s32.totalorder %s27, 0
      %p94 = por %p92, %p93
      %p95 = scmp.ne.s32.totalorder %s87, %s89
      %p96 = scmp.eq.s32.totalorder %s32, 1
      %p97 = por %p95, %p96
      %p98 = scmp.ne.s32.totalorder %s89, %s90
      %p99 = scmp.eq.s32.totalorder %s32, 0
      %p100 = por %p98, %p99
      %p101 = scmp.ne.s32.totalorder %s89, %s90
      %p102 = scmp.eq.s32.totalorder %s33, 1
      %p103 = por %p101, %p102
      %p105 = scmp.ne.s32.totalorder %s90, %s104
      %p106 = scmp.eq.s32.totalorder %s33, 0
      %p107 = por %p105, %p106
      %s109 = sadd.s32 %s108, 1
      %p112 = scmp.eq.s32.totalorder %s27, 1
      %p113 = scmp.ne.s32.totalorder %s108, %s110
      %p114 = scmp.eq.s32.totalorder %s27, 0
      %p115 = por %p113, %p114
      %p116 = scmp.ne.s32.totalorder %s108, %s110
      %p117 = scmp.eq.s32.totalorder %s32, 1
      %p118 = por %p116, %p117
      %p119 = scmp.ne.s32.totalorder %s110, %s111
      %p120 = scmp.eq.s32.totalorder %s32, 0
      %p121 = por %p119, %p120
      %p122 = scmp.ne.s32.totalorder %s110, %s111
      %p123 = scmp.eq.s32.totalorder %s33, 1
      %p124 = por %p122, %p123
      %p126 = scmp.ne.s32.totalorder %s111, %s125
      %p127 = scmp.eq.s32.totalorder %s33, 0
      %p128 = por %p126, %p127
      %s130 = sadd.s32 %s129, 1
      %p133 = scmp.eq.s32.totalorder %s27, 1
      %p134 = scmp.ne.s32.totalorder %s129, %s131
      %p135 = scmp.eq.s32.totalorder %s27, 0
      %p136 = por %p134, %p135
      %p137 = scmp.ne.s32.totalorder %s129, %s131
      %p138 = scmp.eq.s32.totalorder %s32, 1
      %p139 = por %p137, %p138
      %p140 = scmp.ne.s32.totalorder %s131, %s132
      %p141 = scmp.eq.s32.totalorder %s32, 0
      %p142 = por %p140, %p141
      %p143 = scmp.ne.s32.totalorder %s131, %s132
      %p144 = scmp.eq.s32.totalorder %s33, 1
      %p145 = por %p143, %p144
      %p147 = scmp.ne.s32.totalorder %s132, %s146
      %p148 = scmp.eq.s32.totalorder %s33, 0
      %p149 = por %p147, %p148
      %s151 = sadd.s32 %s150, 1
      %p154 = scmp.eq.s32.totalorder %s27, 1
      %p155 = scmp.ne.s32.totalorder %s150, %s152
      %p156 = scmp.eq.s32.totalorder %s27, 0
      %p157 = por %p155, %p156
      %p158 = scmp.ne.s32.totalorder %s150, %s152
      %p159 = scmp.eq.s32.totalorder %s32, 1
      %p160 = por %p158, %p159
      %p161 = scmp.ne.s32.totalorder %s152, %s153
      %p162 = scmp.eq.s32.totalorder %s32, 0
      %p163 = por %p161, %p162
      %p164 = scmp.ne.s32.totalorder %s152, %s153
      %p165 = scmp.eq.s32.totalorder %s33, 1
      %p166 = por %p164, %p165
      %p168 = scmp.ne.s32.totalorder %s153, %s167
      %p169 = scmp.eq.s32.totalorder %s33, 0
      %p170 = por %p168, %p169
      %s172 = sadd.s32 %s171, 1
      %p175 = scmp.eq.s32.totalorder %s27, 1
      %p176 = scmp.ne.s32.totalorder %s171, %s173
      %p177 = scmp.eq.s32.totalorder %s27, 0
      %p178 = por %p176, %p177
      %p179 = scmp.ne.s32.totalorder %s171, %s173
      %p180 = scmp.eq.s32.totalorder %s32, 1
      %p181 = por %p179, %p180
      %p182 = scmp.ne.s32.totalorder %s173, %s174
      %p183 = scmp.eq.s32.totalorder %s32, 0
      %p184 = por %p182, %p183
      %p185 = scmp.ne.s32.totalorder %s173, %s174
      %p186 = scmp.eq.s32.totalorder %s33, 1
      %p187 = por %p185, %p186
      %p189 = scmp.ne.s32.totalorder %s174, %s188
      %p190 = scmp.eq.s32.totalorder %s33, 0
      %p191 = por %p189, %p190
      %s193 = sadd.s32 %s192, 1
      %p196 = scmp.eq.s32.totalorder %s27, 1
      %p197 = scmp.ne.s32.totalorder %s192, %s194
      %p198 = scmp.eq.s32.totalorder %s27, 0
      %p199 = por %p197, %p198
      %p200 = scmp.ne.s32.totalorder %s192, %s194
      %p201 = scmp.eq.s32.totalorder %s32, 1
      %p202 = por %p200, %p201
      %p203 = scmp.ne.s32.totalorder %s194, %s195
      %p204 = scmp.eq.s32.totalorder %s32, 0
      %p205 = por %p203, %p204
      %p206 = scmp.ne.s32.totalorder %s194, %s195
      %p207 = scmp.eq.s32.totalorder %s33, 1
      %p208 = por %p206, %p207
      %p210 = scmp.ne.s32.totalorder %s195, %s209
      %p211 = scmp.eq.s32.totalorder %s33, 0
      %p212 = por %p210, %p211
      %s214 = sadd.s32 %s213, 1
      %p217 = scmp.eq.s32.totalorder %s27, 1
      %p218 = scmp.ne.s32.totalorder %s213, %s215
      %p219 = scmp.eq.s32.totalorder %s27, 0
      %p220 = por %p218, %p219
      %p221 = scmp.ne.s32.totalorder %s213, %s215
      %p222 = scmp.eq.s32.totalorder %s32, 1
      %p223 = por %p221, %p222
      %p224 = scmp.ne.s32.totalorder %s215, %s216
      %p225 = scmp.eq.s32.totalorder %s32, 0
      %p226 = por %p224, %p225
      %p227 = scmp.ne.s32.totalorder %s215, %s216
      %p228 = scmp.eq.s32.totalorder %s33, 1
      %p229 = por %p227, %p228
      %p231 = scmp.ne.s32.totalorder %s216, %s230
      %p232 = scmp.eq.s32.totalorder %s33, 0
      %p233 = por %p231, %p232
      %s235 = sadd.s32 %s234, 1
      %p238 = scmp.eq.s32.totalorder %s27, 1
      %p239 = scmp.ne.s32.totalorder %s234, %s236
      %p240 = scmp.eq.s32.totalorder %s27, 0
      %p241 = por %p239, %p240
      %p242 = scmp.ne.s32.totalorder %s234, %s236
      %p243 = scmp.eq.s32.totalorder %s32, 1
      %p244 = por %p242, %p243
      %p245 = scmp.ne.s32.totalorder %s236, %s237
      %p246 = scmp.eq.s32.totalorder %s32, 0
      %p247 = por %p245, %p246
      %p248 = scmp.ne.s32.totalorder %s236, %s237
      %p249 = scmp.eq.s32.totalorder %s33, 1
      %p250 = por %p248, %p249
      %p252 = scmp.ne.s32.totalorder %s237, %s251
      %p253 = scmp.eq.s32.totalorder %s33, 0
      %p254 = por %p252, %p253
      %s256 = sadd.s32 %s255, 1
      %p259 = scmp.eq.s32.totalorder %s27, 1
      %p260 = scmp.ne.s32.totalorder %s255, %s257
      %p261 = scmp.eq.s32.totalorder %s27, 0
      %p262 = por %p260, %p261
      %p263 = scmp.ne.s32.totalorder %s255, %s257
      %p264 = scmp.eq.s32.totalorder %s32, 1
      %p265 = por %p263, %p264
      %p266 = scmp.ne.s32.totalorder %s257, %s258
      %p267 = scmp.eq.s32.totalorder %s32, 0
      %p268 = por %p266, %p267
      %p269 = scmp.ne.s32.totalorder %s257, %s258
      %p270 = scmp.eq.s32.totalorder %s33, 1
      %p271 = por %p269, %p270
      %p273 = scmp.ne.s32.totalorder %s258, %s272
      %p274 = scmp.eq.s32.totalorder %s33, 0
      %p275 = por %p273, %p274
      %s277 = sadd.s32 %s276, 1
      %p280 = scmp.eq.s32.totalorder %s27, 1
      %p281 = scmp.ne.s32.totalorder %s276, %s278
      %p282 = scmp.eq.s32.totalorder %s27, 0
      %p283 = por %p281, %p282
      %p284 = scmp.ne.s32.totalorder %s276, %s278
      %p285 = scmp.eq.s32.totalorder %s32, 1
      %p286 = por %p284, %p285
      %p287 = scmp.ne.s32.totalorder %s278, %s279
      %p288 = scmp.eq.s32.totalorder %s32, 0
      %p289 = por %p287, %p288
      %p290 = scmp.ne.s32.totalorder %s278, %s279
      %p291 = scmp.eq.s32.totalorder %s33, 1
      %p292 = por %p290, %p291
      %p294 = scmp.ne.s32.totalorder %s279, %s293
      %p295 = scmp.eq.s32.totalorder %s33, 0
      %p296 = por %p294, %p295
      %s298 = sadd.s32 %s297, 1
      %p301 = scmp.eq.s32.totalorder %s27, 1
      %p302 = scmp.ne.s32.totalorder %s297, %s299
      %p303 = scmp.eq.s32.totalorder %s27, 0
      %p304 = por %p302, %p303
      %p305 = scmp.ne.s32.totalorder %s297, %s299
      %p306 = scmp.eq.s32.totalorder %s32, 1
      %p307 = por %p305, %p306
      %p308 = scmp.ne.s32.totalorder %s299, %s300
      %p309 = scmp.eq.s32.totalorder %s32, 0
      %p310 = por %p308, %p309
      %p311 = scmp.ne.s32.totalorder %s299, %s300
      %p312 = scmp.eq.s32.totalorder %s33, 1
      %p313 = por %p311, %p312
      %p315 = scmp.ne.s32.totalorder %s300, %s314
      %p316 = scmp.eq.s32.totalorder %s33, 0
      %p317 = por %p315, %p316
      %s319 = sadd.s32 %s318, 1
      %p322 = scmp.eq.s32.totalorder %s27, 1
      %p323 = scmp.ne.s32.totalorder %s318, %s320
      %p324 = scmp.eq.s32.totalorder %s27, 0
      %p325 = por %p323, %p324
      %p326 = scmp.ne.s32.totalorder %s318, %s320
      %p327 = scmp.eq.s32.totalorder %s32, 1
      %p328 = por %p326, %p327
      %p329 = scmp.ne.s32.totalorder %s320, %s321
      %p330 = scmp.eq.s32.totalorder %s32, 0
      %p331 = por %p329, %p330
      %p332 = scmp.ne.s32.totalorder %s320, %s321
      %p333 = scmp.eq.s32.totalorder %s33, 1
      %p334 = por %p332, %p333
      %p336 = scmp.ne.s32.totalorder %s321, %s335
      %p337 = scmp.eq.s32.totalorder %s33, 0
      %p338 = por %p336, %p337
      %s339 = ssub.s32 %s27, %s34
      %p340 = scmp.eq.s32.totalorder %s339, 0
      %s342 = sadd.s32 %s341, 1
      %s343 = scalar_select %p340, %s341, %s342
      %p346 = pneg %p340
      %p347 = scmp.eq.s32.totalorder %s27, 1
      %p348 = por %p346, %p347
      %p349 = scmp.ne.s32.totalorder %s341, %s344
      %p350 = scmp.eq.s32.totalorder %s27, 0
      %p351 = por %p349, %p350
      %p352 = scmp.ne.s32.totalorder %s341, %s344
      %p353 = scmp.eq.s32.totalorder %s32, 1
      %p354 = por %p352, %p353
      %p355 = scmp.ne.s32.totalorder %s344, %s345
      %p356 = scmp.eq.s32.totalorder %s32, 0
      %p357 = por %p355, %p356
      %p358 = scmp.ne.s32.totalorder %s344, %s345
      %p359 = scmp.eq.s32.totalorder %s33, 1
      %p360 = por %p358, %p359
      %p362 = scmp.ne.s32.totalorder %s345, %s361
      %p363 = scmp.eq.s32.totalorder %s33, 0
      %p364 = por %p362, %p363
      %p365 = scmp.le.s32.totalorder 1, %s27
      %p366 = scmp.lt.s32.totalorder %s27, 3
      %p367 = pnand %p365, %p366
      %p368 = pneg %p367
      // Predicated region
      $region9: #{tpu_custom_call.1} parent=5 // pred_check
        _
      $region10: #{tpu_custom_call.1} parent=5 // pred_check_branch
        %370 = sbr.rel (%p367) target = $region12
      $region11: #{tpu_custom_call.1} parent=5 // pred_region
        %s371 = ssub.s32 %s27, 1
        // Predicated region
        $region13: #{tpu_custom_call.1} parent=11 // pred_check
          %p372 = pneg %p100
        $region14: #{tpu_custom_call.1} parent=11 // pred_check_branch
          %374 = sbr.rel (%p372) target = $region16
        $region15: #{tpu_custom_call.1} parent=11 // pred_region
          _
        $region16: #{tpu_custom_call.1} parent=11 // pred_fallthru
          _
        // Predicated region
        $region17: #{tpu_custom_call.1} parent=11 // pred_check
          %p375 = pneg %p121
        $region18: #{tpu_custom_call.1} parent=11 // pred_check_branch
          %377 = sbr.rel (%p375) target = $region20
        $region19: #{tpu_custom_call.1} parent=11 // pred_region
          _
        $region20: #{tpu_custom_call.1} parent=11 // pred_fallthru
          _
        // Predicated region
        $region21: #{tpu_custom_call.1} parent=11 // pred_check
          %p378 = pneg %p142
        $region22: #{tpu_custom_call.1} parent=11 // pred_check_branch
          %380 = sbr.rel (%p378) target = $region24
        $region23: #{tpu_custom_call.1} parent=11 // pred_region
          _
        $region24: #{tpu_custom_call.1} parent=11 // pred_fallthru
          _
        // Predicated region
        $region25: #{tpu_custom_call.1} parent=11 // pred_check
          %p381 = pneg %p163
        $region26: #{tpu_custom_call.1} parent=11 // pred_check_branch
          %383 = sbr.rel (%p381) target = $region28
        $region27: #{tpu_custom_call.1} parent=11 // pred_region
          _
        $region28: #{tpu_custom_call.1} parent=11 // pred_fallthru
          _
        // Predicated region
        $region29: #{tpu_custom_call.1} parent=11 // pred_check
          %p384 = pneg %p184
        $region30: #{tpu_custom_call.1} parent=11 // pred_check_branch
          %386 = sbr.rel (%p384) target = $region32
        $region31: #{tpu_custom_call.1} parent=11 // pred_region
          _
        $region32: #{tpu_custom_call.1} parent=11 // pred_fallthru
          _
        // Predicated region
        $region33: #{tpu_custom_call.1} parent=11 // pred_check
          %p387 = pneg %p205
        $region34: #{tpu_custom_call.1} parent=11 // pred_check_branch
          %389 = sbr.rel (%p387) target = $region36
        $region35: #{tpu_custom_call.1} parent=11 // pred_region
          _
        $region36: #{tpu_custom_call.1} parent=11 // pred_fallthru
          _
        // Predicated region
        $region37: #{tpu_custom_call.1} parent=11 // pred_check
          %p390 = pneg %p226
        $region38: #{tpu_custom_call.1} parent=11 // pred_check_branch
          %392 = sbr.rel (%p390) target = $region40
        $region39: #{tpu_custom_call.1} parent=11 // pred_region
          %394 = vsyncadd [#allocation6], 0
          %s395 = sshll.u32 %s8, 4
          %s396 = int_to_ptr.hbm [resolvable:$true] %s395
          %s397 = sshll.u32 [#allocation5], 4
          %s398 = int_to_ptr.vmem [resolvable:$true] %s397
          %403 = dma.hbm_to_vmem [thread:$0]  %s396, 256, %s398, [#allocation6], 64, 64, 4
        $region40: #{tpu_custom_call.1} parent=11 // pred_fallthru
          _
        // Predicated region
        $region41: #{tpu_custom_call.1} parent=11 // pred_check
          %p404 = pneg %p247
        $region42: #{tpu_custom_call.1} parent=11 // pred_check_branch
          %406 = sbr.rel (%p404) target = $region44
        $region43: #{tpu_custom_call.1} parent=11 // pred_region
          _
        $region44: #{tpu_custom_call.1} parent=11 // pred_fallthru
          _
        // Predicated region
        $region45: #{tpu_custom_call.1} parent=11 // pred_check
          %p407 = pneg %p268
        $region46: #{tpu_custom_call.1} parent=11 // pred_check_branch
          %409 = sbr.rel (%p407) target = $region48
        $region47: #{tpu_custom_call.1} parent=11 // pred_region
          _
        $region48: #{tpu_custom_call.1} parent=11 // pred_fallthru
          _
        // Predicated region
        $region49: #{tpu_custom_call.1} parent=11 // pred_check
          %p410 = pneg %p289
        $region50: #{tpu_custom_call.1} parent=11 // pred_check_branch
          %412 = sbr.rel (%p410) target = $region52
        $region51: #{tpu_custom_call.1} parent=11 // pred_region
          _
        $region52: #{tpu_custom_call.1} parent=11 // pred_fallthru
          _
        // Predicated region
        $region53: #{tpu_custom_call.1} parent=11 // pred_check
          %p413 = pneg %p310
        $region54: #{tpu_custom_call.1} parent=11 // pred_check_branch
          %415 = sbr.rel (%p413) target = $region56
        $region55: #{tpu_custom_call.1} parent=11 // pred_region
          _
        $region56: #{tpu_custom_call.1} parent=11 // pred_fallthru
          _
        // Predicated region
        $region57: #{tpu_custom_call.1} parent=11 // pred_check
          %p416 = pneg %p331
        $region58: #{tpu_custom_call.1} parent=11 // pred_check_branch
          %418 = sbr.rel (%p416) target = $region60
        $region59: #{tpu_custom_call.1} parent=11 // pred_region
          _
        $region60: #{tpu_custom_call.1} parent=11 // pred_fallthru
          _
      $region12: #{tpu_custom_call.1} parent=5 // pred_fallthru
        _
      %p419 = scmp.lt.s32.totalorder %s27, 2
      // Predicated region
      $region61: #{tpu_custom_call.1} parent=5 // pred_check
        %p420 = pneg %p419
      $region62: #{tpu_custom_call.1} parent=5 // pred_check_branch
        %422 = sbr.rel (%p420) target = $region64
      $region63: #{tpu_custom_call.1} parent=5 // pred_region
        // Predicated region
        $region65: #{tpu_custom_call.1} parent=63 // pred_check
          %p423 = pneg %p47
        $region66: #{tpu_custom_call.1} parent=63 // pred_check_branch
          %425 = sbr.rel (%p423) target = $region68
        $region67: #{tpu_custom_call.1} parent=63 // pred_region
          %p426 = scmp.lt.s32.totalorder %s27, 1
          %s427 = scalar_select %p426, %s27, 1
          %s428 = smul.addr %s427, 8
          %s429 = scalar_lea.vmem %s0, %s428
        $region68: #{tpu_custom_call.1} parent=63 // pred_fallthru
          _
        // Predicated region
        $region69: #{tpu_custom_call.1} parent=63 // pred_check
          %p430 = pneg %p73
        $region70: #{tpu_custom_call.1} parent=63 // pred_check_branch
          %432 = sbr.rel (%p430) target = $region72
        $region71: #{tpu_custom_call.1} parent=63 // pred_region
          %s433 = sand.u32 %s63, 1
          %s434 = scalar_lea.sflag [#allocation3], %s433
          %s435 = sand.u32 %s63, 1
          %s436 = scalar_lea.vmem [#allocation2], %s435
          %438 = vsyncadd %s434, 0
          %s439 = scalar_lea.hbm %s1, %s27
          %s441 = sshll.u32 %s439, 4
          %s442 = int_to_ptr.hbm [resolvable:$true] %s441
          %s443 = sshll.u32 %s436, 4
          %s444 = int_to_ptr.vmem [resolvable:$true] %s443
          %446 = dma.hbm_to_vmem [thread:$0]  %s442, 16, %s444, %s434
        $region72: #{tpu_custom_call.1} parent=63 // pred_fallthru
          _
      $region64: #{tpu_custom_call.1} parent=5 // pred_fallthru
        _
      %p447 = scmp.le.s32.totalorder 1, %s27
      %p448 = scmp.lt.s32.totalorder %s27, 3
      %p449 = pnand %p447, %p448
      %p450 = pneg %p449
      // Predicated region
      $region73: #{tpu_custom_call.1} parent=5 // pred_check
        _
      $region74: #{tpu_custom_call.1} parent=5 // pred_check_branch
        %452 = sbr.rel (%p449) target = $region76
      $region75: #{tpu_custom_call.1} parent=5 // pred_region
        %s453 = ssub.s32 %s27, 1
        %s454 = sand.u32 %s66, 1
        %s455 = scalar_lea.sflag [#allocation3], %s454
        %s456 = sand.u32 %s66, 1
        %s457 = scalar_lea.vmem [#allocation2], %s456
        // Predicated region
        $region77: #{tpu_custom_call.1} parent=75 // pred_check
          %p458 = pneg %p79
        $region78: #{tpu_custom_call.1} parent=75 // pred_check_branch
          %460 = sbr.rel (%p458) target = $region80
        $region79: #{tpu_custom_call.1} parent=75 // pred_region
          %462 = dma.done %s455, 16
        $region80: #{tpu_custom_call.1} parent=75 // pred_fallthru
          _
        // Predicated region
        $region81: #{tpu_custom_call.1} parent=75 // pred_check
          %p463 = pneg %p226
        $region82: #{tpu_custom_call.1} parent=75 // pred_check_branch
          %465 = sbr.rel (%p463) target = $region84
        $region83: #{tpu_custom_call.1} parent=75 // pred_region
          %467 = dma.done [#allocation6], 256
        $region84: #{tpu_custom_call.1} parent=75 // pred_fallthru
          _
        %p468 = scmp.lt.s32.totalorder %s32, 1
        %s469 = scalar_select %p468, %s32, 1
        %s470 = smul.addr %s469, 8
        %s471 = scalar_lea.vmem %s0, %s470
        %p472 = pneg %p53
        %p473 = pneg %p50
        %s474 = sand.u32 %s66, 1
        %s475 = scalar_lea.sflag [#allocation3], %s474
        %s476 = sand.u32 %s66, 1
        %s477 = scalar_lea.vmem [#allocation2], %s476
        %p478 = pneg %p79
        %p479 = pneg %p76
        %p480 = pneg %p100
        %p481 = pneg %p97
        %p482 = pneg %p121
        %p483 = pneg %p118
        %p484 = pneg %p142
        %p485 = pneg %p139
        %p486 = pneg %p163
        %p487 = pneg %p160
        %p488 = pneg %p184
        %p489 = pneg %p181
        %p490 = pneg %p205
        %p491 = pneg %p202
        %p492 = pneg %p226
        %p493 = pneg %p223
        %p494 = pneg %p247
        %p495 = pneg %p244
        %p496 = pneg %p268
        %p497 = pneg %p265
        %p498 = pneg %p289
        %p499 = pneg %p286
        %p500 = pneg %p310
        %p501 = pneg %p307
        %p502 = pneg %p331
        %p503 = pneg %p328
        %p504 = pneg %p357
        %p505 = pneg %p354
        %s506 = sand.u32 %s344, 1
        %s507 = scalar_lea.sflag [#allocation4], %s506
        %s508 = sand.u32 %s344, 1
        %s509 = smul.addr %s508, 8
        %s510 = scalar_lea.vmem [#allocation7], %s509
        %p511 = scmp.lt.s32.totalorder %s32, 1
        %s512 = scalar_select %p511, %s32, 1
        %s513 = smul.addr %s512, 8
        %s514 = scalar_lea.vmem %s0, %s513
        %v516 = vld [vmem:[%s457] sm:$0x1]
        %vm517 = vcmp.gt.f32.partialorder %v516, 0.0
        %v518 = vld [vmem:[%s2] sm:$0xf]
        %v519 = vld [vmem:[%s2 + $0x4] sm:$0xf]
        %v520 = vld [vmem:[%s2 + $0x8] sm:$0xf]
        %v521 = vld [vmem:[%s2 + $0xc] sm:$0xf]
        %v522 = vld [vmem:[%s3] sm:$0x1]
        %v523 = vld [vmem:[%s4] sm:$0xf]
        %v524 = vld [vmem:[%s4 + $0x4] sm:$0xf]
        %v525 = vld [vmem:[%s4 + $0x8] sm:$0xf]
        %v526 = vld [vmem:[%s4 + $0xc] sm:$0xf]
        %v527 = vld [vmem:[%s5] sm:$0x1]
        %v528 = vld [vmem:[%s6] sm:$0x1]
        %v529 = vld [vmem:[%s7] sm:$0x1]
        %v530 = vld [vmem:[%s12] sm:$0x1]
        %v531 = vld [vmem:[%s13] sm:$0x1]
        %v532 = vld [vmem:[#allocation5] sm:$0xf]
        %v533 = vld [vmem:[#allocation5 + $0x4] sm:$0xf]
        %v534 = vld [vmem:[#allocation5 + $0x8] sm:$0xf]
        %v535 = vld [vmem:[#allocation5 + $0xc] sm:$0xf]
        %v536 = vld [vmem:[%s9] sm:$0x1]
        %v537 = vld [vmem:[%s10] sm:$0xf]
        %v538 = vld [vmem:[%s10 + $0x4] sm:$0xf]
        %v539 = vld [vmem:[%s10 + $0x8] sm:$0xf]
        %v540 = vld [vmem:[%s10 + $0xc] sm:$0xf]
        %v541 = vld [vmem:[%s10 + $0x10] sm:$0xf]
        %v542 = vld [vmem:[%s10 + $0x14] sm:$0xf]
        %v543 = vld [vmem:[%s10 + $0x18] sm:$0xf]
        %v544 = vld [vmem:[%s10 + $0x1c] sm:$0xf]
        %v545 = vld [vmem:[%s11] sm:$0x1]
        %v546 = vld [vmem:[%s514] sm:$0xff]
        loop: start=0, step=1, limit=2
        $region85: #{tpu_custom_call.1} parent=75 // loop_pre_header
          _
        $region86: #{tpu_custom_call.1} parent=75 // loop_header
          %s548 = sphi 0, %s552
          %p549 = scmp.ge.s32.totalorder %s548, 2
          %v553 = vphi %v546, %v1021
        $region87: #{tpu_custom_call.1} parent=75 // loop_header_branch
          %551 = sbr.rel (%p549) target = $region91
        $region88: #{tpu_custom_call.1} parent=75 // loop_body
          %v554 = vpack.c.bf16 %v553, %v553
          %v556 = vperm.slane %v522, 0
          %v562 = vunpack.c.l.b16 %v518
          %v563 = vunpack.c.l.b16 %v519
          %v564 = vunpack.c.l.b16 %v520
          %v565 = vunpack.c.l.b16 %v521
          %v566 = vpack.c.b16 %v563, %v562
          %v567 = vpack.c.b16 %v565, %v564
          %vm570 = vcmask 261120
          %v572 = vsel %vm570, %v554, 0
          %574 = vmatpush.bf16.msra.mxu0 0
          %575 = vmatpush.bf16.msra.mxu0 0
          %576 = vmatpush.bf16.msra.mxu0 0
          %577 = vmatpush.bf16.msra.mxu0 0
          %578 = vmatpush.bf16.msra.mxu0 0
          %579 = vmatpush.bf16.msra.mxu0 0
          %580 = vmatpush.bf16.msra.mxu0 %v567
          %581 = vmatpush.bf16.msra.mxu0 %v566
          %582 = vmatmul.bf16.gmra.mxu0 %v572
          %v583 = vpop.f32.mrf.mxu0
          %v584 = vadd.f32 %v556, %v583
          %v585 = vpop.f32.mrf.mxu0
          %586 = vdwg.mxu0
          %v587 = vpack.c.bf16 %v584, %v584
          %v589 = vunpack.c.l.b16 %v587
          %v590 = vpack.c.b16 %v589, %v589
          %591 = vrot.lane.b32.xlu0 %v590, 96
          %v592 = vpop.permute.xlu0 %591
          %vm593 = vcmask 64512
          %v595 = vsel %vm593, %v587, 0
          %v598 = vsel %vm593, %v592, 0
          %600 = vmatpush.bf16.xpose.msra.mxu0 0
          %601 = vmatpush.bf16.xpose.msra.mxu0 0
          %602 = vmatpush.bf16.xpose.msra.mxu0 0
          %603 = vmatpush.bf16.xpose.msra.mxu0 0
          %604 = vmatpush.bf16.xpose.msra.mxu0 0
          %605 = vmatpush.bf16.xpose.msra.mxu0 0
          %606 = vmatpush.bf16.xpose.msra.mxu0 0
          %607 = vmatpush.bf16.xpose.msra.mxu0 %v598
          %608 = vmatmul.bf16.gmra.mxu0 %v595
          %v609 = vpop.f32.mrf.mxu0
          %v610 = vadd.f32 0.0, %v609
          %v611 = vpop.f32.mrf.mxu0
          %612 = vdwg.mxu0
          %v613 = vmul.f32 %v610, 0.17677669
          %v614 = vsel %vm517, 1, 0
          %v615 = vperm.slane %v614, 0
          %vm616 = vcmp.eq.s32.totalorder %v615, 1
          %v617 = vsel %vm616, %v613, -1e+20
          %v618 = vsel %vm593, %v617, -inf
          %619 = vmax.xlane.f32.xlu0 %v618
          %v620 = vpop.xlane.xlu0 %619
          %v621 = vsub.f32 %v617, %v620
          %v622 = vmul.f32 %v621, 1.442695
          %v623 = vpow.pop %v622
          %v624 = vsel %vm593, %v623, 0.0
          %625 = vadd.xlane.f32.xlu0 %v624
          %v626 = vpop.xlane.xlu0 %625
          %v627 = vrcp.pop %v626
          %v628 = vmul.f32 %v623, %v627
          %v629 = vpack.c.bf16 %v628, %v628
          %630 = vrot.lane.b32.xlu0 %v590, 64
          %v631 = vpop.permute.xlu0 %630
          %v633 = vsel %vm593, %v629, 0
          %vm635 = vcmask 1043456
          %v637 = vsel %vm635, %v631, 0
          %639 = vmatpush.bf16.msra.mxu0 0
          %640 = vmatpush.bf16.msra.mxu0 0
          %641 = vmatpush.bf16.msra.mxu0 0
          %642 = vmatpush.bf16.msra.mxu0 0
          %643 = vmatpush.bf16.msra.mxu0 0
          %644 = vmatpush.bf16.msra.mxu0 0
          %645 = vmatpush.bf16.msra.mxu0 0
          %646 = vmatpush.bf16.msra.mxu0 %v637
          %647 = vmatmul.bf16.gmra.mxu0 %v633
          %v648 = vpop.f32.mrf.mxu0
          %v649 = vadd.f32 0.0, %v648
          %v650 = vpop.f32.mrf.mxu0
          %651 = vdwg.mxu0
          %652 = vrot.lane.b32.xlu0 %v590, 120
          %v653 = vpop.permute.xlu0 %652
          %654 = vrot.lane.b32.xlu0 %v590, 88
          %v655 = vpop.permute.xlu0 %654
          %v657 = vsel %vm593, %v653, 0
          %v660 = vsel %vm593, %v655, 0
          %662 = vmatpush.bf16.xpose.msra.mxu0 0
          %663 = vmatpush.bf16.xpose.msra.mxu0 0
          %664 = vmatpush.bf16.xpose.msra.mxu0 0
          %665 = vmatpush.bf16.xpose.msra.mxu0 0
          %666 = vmatpush.bf16.xpose.msra.mxu0 0
          %667 = vmatpush.bf16.xpose.msra.mxu0 0
          %668 = vmatpush.bf16.xpose.msra.mxu0 0
          %669 = vmatpush.bf16.xpose.msra.mxu0 %v660
          %670 = vmatmul.bf16.gmra.mxu0 %v657
          %v671 = vpop.f32.mrf.mxu0
          %v672 = vadd.f32 0.0, %v671
          %v673 = vpop.f32.mrf.mxu0
          %674 = vdwg.mxu0
          %v675 = vmul.f32 %v672, 0.17677669
          %v676 = vsel %vm616, %v675, -1e+20
          %v677 = vsel %vm593, %v676, -inf
          %678 = vmax.xlane.f32.xlu0 %v677
          %v679 = vpop.xlane.xlu0 %678
          %v680 = vsub.f32 %v676, %v679
          %v681 = vmul.f32 %v680, 1.442695
          %v682 = vpow.pop %v681
          %v683 = vsel %vm593, %v682, 0.0
          %684 = vadd.xlane.f32.xlu0 %v683
          %v685 = vpop.xlane.xlu0 %684
          %v686 = vrcp.pop %v685
          %v687 = vmul.f32 %v682, %v686
          %v688 = vpack.c.bf16 %v687, %v687
          %689 = vrot.lane.b32.xlu0 %v590, 56
          %v690 = vpop.permute.xlu0 %689
          %v692 = vsel %vm593, %v688, 0
          %v695 = vsel %vm635, %v690, 0
          %697 = vmatpush.bf16.msra.mxu0 0
          %698 = vmatpush.bf16.msra.mxu0 0
          %699 = vmatpush.bf16.msra.mxu0 0
          %700 = vmatpush.bf16.msra.mxu0 0
          %701 = vmatpush.bf16.msra.mxu0 0
          %702 = vmatpush.bf16.msra.mxu0 0
          %703 = vmatpush.bf16.msra.mxu0 0
          %704 = vmatpush.bf16.msra.mxu0 %v695
          %705 = vmatmul.bf16.gmra.mxu0 %v692
          %v706 = vpop.f32.mrf.mxu0
          %v707 = vadd.f32 0.0, %v706
          %v708 = vpop.f32.mrf.mxu0
          %709 = vdwg.mxu0
          %710 = vrot.lane.b32.xlu0 %v590, 112
          %v711 = vpop.permute.xlu0 %710
          %712 = vrot.lane.b32.xlu0 %v590, 80
          %v713 = vpop.permute.xlu0 %712
          %v715 = vsel %vm593, %v711, 0
          %v718 = vsel %vm593, %v713, 0
          %720 = vmatpush.bf16.xpose.msra.mxu0 0
          %721 = vmatpush.bf16.xpose.msra.mxu0 0
          %722 = vmatpush.bf16.xpose.msra.mxu0 0
          %723 = vmatpush.bf16.xpose.msra.mxu0 0
          %724 = vmatpush.bf16.xpose.msra.mxu0 0
          %725 = vmatpush.bf16.xpose.msra.mxu0 0
          %726 = vmatpush.bf16.xpose.msra.mxu0 0
          %727 = vmatpush.bf16.xpose.msra.mxu0 %v718
          %728 = vmatmul.bf16.gmra.mxu0 %v715
          %v729 = vpop.f32.mrf.mxu0
          %v730 = vadd.f32 0.0, %v729
          %v731 = vpop.f32.mrf.mxu0
          %732 = vdwg.mxu0
          %v733 = vmul.f32 %v730, 0.17677669
          %v734 = vsel %vm616, %v733, -1e+20
          %v735 = vsel %vm593, %v734, -inf
          %736 = vmax.xlane.f32.xlu0 %v735
          %v737 = vpop.xlane.xlu0 %736
          %v738 = vsub.f32 %v734, %v737
          %v739 = vmul.f32 %v738, 1.442695
          %v740 = vpow.pop %v739
          %v741 = vsel %vm593, %v740, 0.0
          %742 = vadd.xlane.f32.xlu0 %v741
          %v743 = vpop.xlane.xlu0 %742
          %v744 = vrcp.pop %v743
          %v745 = vmul.f32 %v740, %v744
          %v746 = vpack.c.bf16 %v745, %v745
          %747 = vrot.lane.b32.xlu0 %v590, 48
          %v748 = vpop.permute.xlu0 %747
          %v750 = vsel %vm593, %v746, 0
          %v753 = vsel %vm635, %v748, 0
          %755 = vmatpush.bf16.msra.mxu0 0
          %756 = vmatpush.bf16.msra.mxu0 0
          %757 = vmatpush.bf16.msra.mxu0 0
          %758 = vmatpush.bf16.msra.mxu0 0
          %759 = vmatpush.bf16.msra.mxu0 0
          %760 = vmatpush.bf16.msra.mxu0 0
          %761 = vmatpush.bf16.msra.mxu0 0
          %762 = vmatpush.bf16.msra.mxu0 %v753
          %763 = vmatmul.bf16.gmra.mxu0 %v750
          %v764 = vpop.f32.mrf.mxu0
          %v765 = vadd.f32 0.0, %v764
          %v766 = vpop.f32.mrf.mxu0
          %767 = vdwg.mxu0
          %768 = vrot.lane.b32.xlu0 %v590, 104
          %v769 = vpop.permute.xlu0 %768
          %770 = vrot.lane.b32.xlu0 %v590, 72
          %v771 = vpop.permute.xlu0 %770
          %v773 = vsel %vm593, %v769, 0
          %v776 = vsel %vm593, %v771, 0
          %778 = vmatpush.bf16.xpose.msra.mxu0 0
          %779 = vmatpush.bf16.xpose.msra.mxu0 0
          %780 = vmatpush.bf16.xpose.msra.mxu0 0
          %781 = vmatpush.bf16.xpose.msra.mxu0 0
          %782 = vmatpush.bf16.xpose.msra.mxu0 0
          %783 = vmatpush.bf16.xpose.msra.mxu0 0
          %784 = vmatpush.bf16.xpose.msra.mxu0 0
          %785 = vmatpush.bf16.xpose.msra.mxu0 %v776
          %786 = vmatmul.bf16.gmra.mxu0 %v773
          %v787 = vpop.f32.mrf.mxu0
          %v788 = vadd.f32 0.0, %v787
          %v789 = vpop.f32.mrf.mxu0
          %790 = vdwg.mxu0
          %v791 = vmul.f32 %v788, 0.17677669
          %v792 = vsel %vm616, %v791, -1e+20
          %v793 = vsel %vm593, %v792, -inf
          %794 = vmax.xlane.f32.xlu0 %v793
          %v795 = vpop.xlane.xlu0 %794
          %v796 = vsub.f32 %v792, %v795
          %v797 = vmul.f32 %v796, 1.442695
          %v798 = vpow.pop %v797
          %v799 = vsel %vm593, %v798, 0.0
          %800 = vadd.xlane.f32.xlu0 %v799
          %v801 = vpop.xlane.xlu0 %800
          %v802 = vrcp.pop %v801
          %v803 = vmul.f32 %v798, %v802
          %v804 = vpack.c.bf16 %v803, %v803
          %805 = vrot.lane.b32.xlu0 %v590, 40
          %v806 = vpop.permute.xlu0 %805
          %v808 = vsel %vm593, %v804, 0
          %v811 = vsel %vm635, %v806, 0
          %813 = vmatpush.bf16.msra.mxu0 0
          %814 = vmatpush.bf16.msra.mxu0 0
          %815 = vmatpush.bf16.msra.mxu0 0
          %816 = vmatpush.bf16.msra.mxu0 0
          %817 = vmatpush.bf16.msra.mxu0 0
          %818 = vmatpush.bf16.msra.mxu0 0
          %819 = vmatpush.bf16.msra.mxu0 0
          %820 = vmatpush.bf16.msra.mxu0 %v811
          %821 = vmatmul.bf16.gmra.mxu0 %v808
          %v822 = vpop.f32.mrf.mxu0
          %v823 = vadd.f32 0.0, %v822
          %v824 = vpop.f32.mrf.mxu0
          %825 = vdwg.mxu0
          %827 = vrot.lane.b32.xlu0 %v707, 8
          %v828 = vpop.permute.xlu0 %827
          %831 = vrot.lane.b32.xlu0 %v765, 16
          %v832 = vpop.permute.xlu0 %831
          %835 = vrot.lane.b32.xlu0 %v823, 24
          %v836 = vpop.permute.xlu0 %835
          %v838 = vsel %vm593, %v649, %v828
          %vm839 = vcmask 130048
          %v840 = vsel %vm839, %v838, %v832
          %vm841 = vcmask 195584
          %v842 = vsel %vm841, %v840, %v836
          %v843 = vpack.c.bf16 %v842, %v842
          %v845 = vperm.slane %v527, 0
          %v851 = vunpack.c.l.b16 %v523
          %v852 = vunpack.c.l.b16 %v524
          %v853 = vunpack.c.l.b16 %v525
          %v854 = vunpack.c.l.b16 %v526
          %v855 = vpack.c.b16 %v852, %v851
          %v856 = vpack.c.b16 %v854, %v853
          %v860 = vsel %vm570, %v843, 0
          %862 = vmatpush.bf16.msra.mxu0 0
          %863 = vmatpush.bf16.msra.mxu0 0
          %864 = vmatpush.bf16.msra.mxu0 0
          %865 = vmatpush.bf16.msra.mxu0 0
          %866 = vmatpush.bf16.msra.mxu0 0
          %867 = vmatpush.bf16.msra.mxu0 0
          %868 = vmatpush.bf16.msra.mxu0 %v856
          %869 = vmatpush.bf16.msra.mxu0 %v855
          %870 = vmatmul.bf16.gmra.mxu0 %v860
          %v871 = vpop.f32.mrf.mxu0
          %v872 = vadd.f32 %v845, %v871
          %v873 = vpop.f32.mrf.mxu0
          %874 = vdwg.mxu0
          %v875 = vadd.f32 %v872, %v553
          %v876 = vsel %vm570, %v875, 0.0
          %877 = vadd.xlane.f32.xlu0 %v876
          %v878 = vpop.xlane.xlu0 %877
          %v879 = vrcp.pop 32.0
          %v880 = vmul.f32 32.0, %v879
          %v881 = vsub.f32 1.0, %v880
          %v882 = vmul.f32 %v879, %v881
          %v883 = vadd.f32 %v879, %v882
          %vm884 = vweird.f32 %v879
          %v885 = vsel %vm884, %v879, %v883
          %v886 = vmul.f32 %v878, %v885
          %v887 = vsub.f32 %v875, %v886
          %v888 = vmul.f32 %v887, %v887
          %v889 = vsel %vm570, %v888, 0.0
          %890 = vadd.xlane.f32.xlu0 %v889
          %v891 = vpop.xlane.xlu0 %890
          %v892 = vmul.f32 %v891, %v885
          %v893 = vadd.f32 %v892, 1e-05
          %v894 = vrsqrt.pop %v893
          %v895 = vmul.f32 %v894, %v893
          %v896 = vmul.f32 %v895, %v894
          %v897 = vmul.f32 0.5, %v896
          %v898 = vsub.f32 1.5, %v897
          %v899 = vmul.f32 %v894, %v898
          %vm900 = vweird.f32 %v893
          %vm901 = vweird.f32 %v894
          %vm902 = vmor %vm900, %vm901
          %v903 = vsel %vm902, %v894, %v899
          %v904 = vmul.f32 %v887, %v903
          %v906 = vperm.slane %v528, 0
          %v908 = vmul.f32 %v904, %v906
          %v910 = vperm.slane %v529, 0
          %v912 = vadd.f32 %v908, %v910
          %v913 = vpack.c.bf16 %v912, %v912
          %v915 = vperm.slane %v536, 0
          %v921 = vunpack.c.l.b16 %v532
          %v922 = vunpack.c.l.b16 %v533
          %v923 = vunpack.c.l.b16 %v534
          %v924 = vunpack.c.l.b16 %v535
          %v925 = vpack.c.b16 %v922, %v921
          %v926 = vpack.c.b16 %v924, %v923
          %v930 = vsel %vm570, %v913, 0
          %932 = vmatpush.bf16.msra.mxu0 0
          %933 = vmatpush.bf16.msra.mxu0 0
          %934 = vmatpush.bf16.msra.mxu0 0
          %935 = vmatpush.bf16.msra.mxu0 0
          %936 = vmatpush.bf16.msra.mxu0 0
          %937 = vmatpush.bf16.msra.mxu0 0
          %938 = vmatpush.bf16.msra.mxu0 %v926
          %939 = vmatpush.bf16.msra.mxu0 %v925
          %940 = vmatmul.bf16.gmra.mxu0 %v930
          %v941 = vpop.f32.mrf.mxu0
          %v942 = vadd.f32 %v915, %v941
          %v943 = vpop.f32.mrf.mxu0
          %944 = vdwg.mxu0
          %v945 = vmax.f32 %v942, 0.0
          %v946 = vpack.c.bf16 %v945, %v945
          %v948 = vperm.slane %v545, 0
          %v958 = vunpack.c.l.b16 %v537
          %v959 = vunpack.c.l.b16 %v538
          %v960 = vunpack.c.l.b16 %v539
          %v961 = vunpack.c.l.b16 %v540
          %v962 = vunpack.c.l.b16 %v541
          %v963 = vunpack.c.l.b16 %v542
          %v964 = vunpack.c.l.b16 %v543
          %v965 = vunpack.c.l.b16 %v544
          %v966 = vpack.c.b16 %v959, %v958
          %v967 = vpack.c.b16 %v961, %v960
          %v968 = vpack.c.b16 %v963, %v962
          %v969 = vpack.c.b16 %v965, %v964
          %vm974 = vcmask 523264
          %v976 = vsel %vm974, %v946, 0
          %978 = vmatpush.bf16.msra.mxu0 0
          %979 = vmatpush.bf16.msra.mxu0 0
          %980 = vmatpush.bf16.msra.mxu0 0
          %981 = vmatpush.bf16.msra.mxu0 0
          %982 = vmatpush.bf16.msra.mxu0 %v969
          %983 = vmatpush.bf16.msra.mxu0 %v968
          %984 = vmatpush.bf16.msra.mxu0 %v967
          %985 = vmatpush.bf16.msra.mxu0 %v966
          %986 = vmatmul.bf16.gmra.mxu0 %v976
          %v987 = vpop.f32.mrf.mxu0
          %v988 = vadd.f32 %v948, %v987
          %v989 = vpop.f32.mrf.mxu0
          %990 = vdwg.mxu0
          %v991 = vadd.f32 %v988, %v912
          %v992 = vsel %vm570, %v991, 0.0
          %993 = vadd.xlane.f32.xlu0 %v992
          %v994 = vpop.xlane.xlu0 %993
          %v995 = vmul.f32 %v994, %v885
          %v996 = vsub.f32 %v991, %v995
          %v997 = vmul.f32 %v996, %v996
          %v998 = vsel %vm570, %v997, 0.0
          %999 = vadd.xlane.f32.xlu0 %v998
          %v1000 = vpop.xlane.xlu0 %999
          %v1001 = vmul.f32 %v1000, %v885
          %v1002 = vadd.f32 %v1001, 1e-05
          %v1003 = vrsqrt.pop %v1002
          %v1004 = vmul.f32 %v1003, %v1002
          %v1005 = vmul.f32 %v1004, %v1003
          %v1006 = vmul.f32 0.5, %v1005
          %v1007 = vsub.f32 1.5, %v1006
          %v1008 = vmul.f32 %v1003, %v1007
          %vm1009 = vweird.f32 %v1002
          %vm1010 = vweird.f32 %v1003
          %vm1011 = vmor %vm1009, %vm1010
          %v1012 = vsel %vm1011, %v1003, %v1008
          %v1013 = vmul.f32 %v996, %v1012
          %v1015 = vperm.slane %v530, 0
          %v1017 = vmul.f32 %v1013, %v1015
          %v1019 = vperm.slane %v531, 0
          %v1021 = vadd.f32 %v1017, %v1019
        $region89: #{tpu_custom_call.1} parent=75 // loop_footer
          %s552 = sadd.s32 1, %s548
        $region90: #{tpu_custom_call.1} parent=75 // loop_footer_branch
          %547 = sbr.rel target = $region86
        $region91: #{tpu_custom_call.1} parent=75 // loop_exit
          _
        %vm1022 = vcmask 261120
        %1023 = vst.msk [vmem:[%s510] sm:$0xff] %vm1022, %v553
        %s1024 = sand.u32 %s344, 1
        %s1025 = scalar_lea.sflag [#allocation4], %s1024
        %s1026 = sand.u32 %s344, 1
        %s1027 = smul.addr %s1026, 8
        %s1028 = scalar_lea.vmem [#allocation7], %s1027
        // Predicated region
        $region92: #{tpu_custom_call.1} parent=75 // pred_check
          %p1029 = pneg %p354
        $region93: #{tpu_custom_call.1} parent=75 // pred_check_branch
          %1031 = sbr.rel (%p1029) target = $region95
        $region94: #{tpu_custom_call.1} parent=75 // pred_region
          %1033 = vsyncadd %s1025, 0
          %s1034 = smul.addr %s32, 8
          %s1035 = scalar_lea.hbm %s14, %s1034
          %s1037 = sshll.u32 %s1028, 4
          %s1038 = int_to_ptr.vmem [resolvable:$true] %s1037
          %s1039 = sshll.u32 %s1035, 4
          %s1040 = int_to_ptr.hbm [resolvable:$true] %s1039
          %1042 = dma.vmem_to_hbm [thread:$0]  %s1038, 128, %s1040, %s1025
        $region95: #{tpu_custom_call.1} parent=75 // pred_fallthru
          _
      $region76: #{tpu_custom_call.1} parent=5 // pred_fallthru
        _
      %p1043 = scmp.le.s32.totalorder 2, %s27
      // Predicated region
      $region96: #{tpu_custom_call.1} parent=5 // pred_check
        %p1044 = pneg %p1043
      $region97: #{tpu_custom_call.1} parent=5 // pred_check_branch
        %1046 = sbr.rel (%p1044) target = $region99
      $region98: #{tpu_custom_call.1} parent=5 // pred_region
        %s1047 = ssub.s32 %s27, 2
        // Predicated region
        $region100: #{tpu_custom_call.1} parent=98 // pred_check
          %p1048 = pneg %p360
        $region101: #{tpu_custom_call.1} parent=98 // pred_check_branch
          %1050 = sbr.rel (%p1048) target = $region103
        $region102: #{tpu_custom_call.1} parent=98 // pred_region
          %s1051 = sand.u32 %s345, 1
          %s1052 = scalar_lea.sflag [#allocation4], %s1051
          %s1053 = sand.u32 %s345, 1
          %s1054 = smul.addr %s1053, 8
          %s1055 = scalar_lea.vmem [#allocation7], %s1054
          %1057 = dma.done %s1052, 128
        $region103: #{tpu_custom_call.1} parent=98 // pred_fallthru
          _
      $region99: #{tpu_custom_call.1} parent=5 // pred_fallthru
        _
    $region6: #{tpu_custom_call.1} parent=1 // loop_footer
      %s31 = sadd.s32 1, %s27
    $region7: #{tpu_custom_call.1} parent=1 // loop_footer_branch
      %26 = sbr.rel target = $region3
    $region8: #{tpu_custom_call.1} parent=1 // loop_exit
      _
    %1058 = vsyncpa [#allocation3], 1
    %s1059 = scalar_lea.sflag [#allocation3], 1
    %1060 = vsyncpa %s1059, 1
    %1061 = vsyncpa [#allocation6], 1
    %1062 = vsyncpa [#allocation4], 1
    %s1063 = scalar_lea.sflag [#allocation4], 1
    %1064 = vsyncpa %s1063, 1

</llo_original>
